<compile_context>
chip_gen: v7x
topology: tpu7x:2x2x1
jax: 0.10.0
libtpu: 0.0.40
codegen_flags: <defaults>
</compile_context>

<pallas_src>
import functools

import jax
import jax.numpy as jnp
from jax.experimental import pallas as pl
from jax.experimental.pallas import tpu as pltpu


# ----------------------------------------------------------------------------
# Fused: mask -> GCN layer 1 (relu) -> GCN layer 2 -> mean-node readout.
# ----------------------------------------------------------------------------
def _fused_gnn_kernel(a_ref, x_ref, w1_ref, b1_ref, w2_ref, b2_ref,
                      h_ref, pooled_ref, *, inv_n):
    # Zero-feature node masking (single grid step -> computed exactly once).
    x = x_ref[...]                                                   # (N, D_in) bf16
    row_sum = jnp.sum(x.astype(jnp.float32), axis=1, keepdims=True)  # (N, 1) f32
    x = x * (row_sum != 0.0).astype(x.dtype)

    a = a_ref[...]                                                   # (N, N) bf16

    # Layer 1: project-then-aggregate keeps the N^2 matmul lane-dense (D_hid=128
    # output lanes) and does the D_in->D_hid projection once for the whole graph.
    xw1 = jnp.dot(x, w1_ref[...], preferred_element_type=jnp.float32)        # (N, D_hid)
    h1 = jnp.dot(a, xw1.astype(jnp.bfloat16),
                 preferred_element_type=jnp.float32)                         # (N, D_hid)
    h1 = jnp.maximum(h1 + b1_ref[...], 0.0)

    # Layer 2: same ordering; no activation on the last layer.
    hw2 = jnp.dot(h1.astype(jnp.bfloat16), w2_ref[...],
                  preferred_element_type=jnp.float32)                        # (N, D_hid)
    h2 = jnp.dot(a, hw2.astype(jnp.bfloat16),
                 preferred_element_type=jnp.float32)                         # (N, D_hid)
    h2 = h2 + b2_ref[...]

    # Dropout: eval-mode identity.
    h_ref[...] = h2.astype(h_ref.dtype)

    # Fused mean-node readout, accumulated in f32 (no separate launch).
    pooled_ref[...] = (jnp.sum(h2, axis=0, keepdims=True) * inv_n).astype(
        pooled_ref.dtype)


def custom_gnn_forward(a_norm, x, params, readout=True):
    """a_norm: (N, N) symmetric-normalized adjacency; x: (N, D_in) node features.

    params = [(W1 (D_in, D_hid), b1 (1, D_hid)), (W2 (D_hid, D_hid), b2 (1, D_hid))].
    Returns (pooled, node_feats) if readout else node_feats (all f32).
    """
    (w1, b1), (w2, b2) = params
    N, d_in = x.shape
    d_hid = w1.shape[1]

    # bf16 streams for adjacency / activations / weights; f32 biases + outputs.
    a_bf = a_norm.astype(jnp.bfloat16)
    x_bf = x.astype(jnp.bfloat16)
    w1_bf = w1.astype(jnp.bfloat16)
    w2_bf = w2.astype(jnp.bfloat16)

    kernel = functools.partial(_fused_gnn_kernel, inv_n=1.0 / N)
    h, pooled = pl.pallas_call(
        kernel,
        out_shape=(
            jax.ShapeDtypeStruct((N, d_hid), jnp.float32),   # node features
            jax.ShapeDtypeStruct((1, d_hid), jnp.float32),   # mean-node readout
        ),
        grid_spec=pl.GridSpec(
            grid=(1,),                                       # everything resident
            in_specs=[
                pl.BlockSpec((N, N), lambda i: (0, 0)),          # A_norm (bf16)
                pl.BlockSpec((N, d_in), lambda i: (0, 0)),       # X (bf16)
                pl.BlockSpec((d_in, d_hid), lambda i: (0, 0)),   # W1 (bf16)
                pl.BlockSpec((1, d_hid), lambda i: (0, 0)),      # b1 (f32)
                pl.BlockSpec((d_hid, d_hid), lambda i: (0, 0)),  # W2 (bf16)
                pl.BlockSpec((1, d_hid), lambda i: (0, 0)),      # b2 (f32)
            ],
            out_specs=(
                pl.BlockSpec((N, d_hid), lambda i: (0, 0)),
                pl.BlockSpec((1, d_hid), lambda i: (0, 0)),
            ),
        ),
        compiler_params=pltpu.CompilerParams(
            dimension_semantics=("arbitrary",),
            vmem_limit_bytes=32 * 1024 * 1024,   # total residents ~0.5 MiB; ample
        ),
    )(a_bf, x_bf, w1_bf, b1, w2_bf, b2)

    if not readout:
        return h
    return pooled, h


if __name__ == "__main__":
    # Shapes implied by the module: speed_dim=32, speed_hid=128, 2 layers,
    # single graph with 256 nodes.
    N, D_IN, D_HID = 256, 32, 128

    key = jax.random.PRNGKey(0)
    k_x, k_adj, k_w1, k_b1, k_w2, k_b2 = jax.random.split(key, 6)

    x = jax.random.normal(k_x, (N, D_IN), dtype=jnp.float32)
    x = x.at[::17].set(0.0)                      # all-zero nodes -> exercise mask

    # Random undirected graph + self loops, symmetric ('both') normalization.
    logits = jax.random.uniform(k_adj, (N, N), dtype=jnp.float32)
    adj = ((logits + logits.T) > 1.7).astype(jnp.float32)
    adj = jnp.minimum(adj + jnp.eye(N, dtype=jnp.float32), 1.0)
    d_inv_sqrt = 1.0 / jnp.sqrt(adj.sum(axis=1))
    a_norm = adj * d_inv_sqrt[:, None] * d_inv_sqrt[None, :]

    def init_linear(kw, kb, d_in, d_out):
        bound = 1.0 / (d_in ** 0.5)
        w = jax.random.uniform(kw, (d_in, d_out), jnp.float32, -bound, bound)
        b = jax.random.uniform(kb, (1, d_out), jnp.float32, -bound, bound)
        return w, b

    params = [
        init_linear(k_w1, k_b1, D_IN, D_HID),
        init_linear(k_w2, k_b2, D_HID, D_HID),
    ]

    pooled, node_feats = custom_gnn_forward(a_norm, x, params, readout=True)
    pooled = jax.block_until_ready(pooled)
    node_feats = jax.block_until_ready(node_feats)

    # Pure-JAX reference mirroring the kernel's bf16 streaming / f32 accumulation.
    a_bf = a_norm.astype(jnp.bfloat16)
    x_bf = x.astype(jnp.bfloat16)
    w1_bf, b1 = params[0][0].astype(jnp.bfloat16), params[0][1]
    w2_bf, b2 = params[1][0].astype(jnp.bfloat16), params[1][1]

    mask = (jnp.sum(x_bf.astype(jnp.float32), axis=1, keepdims=True) != 0.0)
    xm = x_bf * mask.astype(x_bf.dtype)
    xw1 = jnp.dot(xm, w1_bf, preferred_element_type=jnp.float32)
    h1 = jnp.maximum(
        jnp.dot(a_bf, xw1.astype(jnp.bfloat16),
                preferred_element_type=jnp.float32) + b1, 0.0)
    hw2 = jnp.dot(h1.astype(jnp.bfloat16), w2_bf,
                  preferred_element_type=jnp.float32)
    h2 = jnp.dot(a_bf, hw2.astype(jnp.bfloat16),
                 preferred_element_type=jnp.float32) + b2
    ref_pooled = jnp.mean(h2, axis=0, keepdims=True)

    assert pooled.shape == (1, D_HID)
    assert node_feats.shape == (N, D_HID)
    assert jnp.allclose(node_feats, h2, atol=1e-2, rtol=1e-2)
    assert jnp.allclose(pooled, ref_pooled, atol=1e-2, rtol=1e-2)

    print("KERNEL_OK")
</pallas_src>

<mosaic_0001>
module attributes {stable_mosaic.version = 11 : i64} {
  func.func @_fused_gnn_kernel(%arg0: i32, %arg1: memref<256x256xbf16, #tpu.memory_space<vmem>>, %arg2: memref<256x32xbf16, #tpu.memory_space<vmem>>, %arg3: memref<32x128xbf16, #tpu.memory_space<vmem>>, %arg4: memref<1x128xf32, #tpu.memory_space<vmem>>, %arg5: memref<128x128xbf16, #tpu.memory_space<vmem>>, %arg6: memref<1x128xf32, #tpu.memory_space<vmem>>, %arg7: memref<256x128xf32, #tpu.memory_space<vmem>>, %arg8: memref<1x128xf32, #tpu.memory_space<vmem>>) attributes {dimension_semantics = [#tpu.dimension_semantics<arbitrary>], iteration_bounds = array<i64: 1>, scalar_prefetch = 0 : i64, scratch_operands = 0 : i64, tpu.core_type = #tpu.core_type<tc>, window_params = [{pipeline_mode = #tpu.pipeline_mode<synchronous>, transform_indices = @transform_0, window_bounds = array<i64: 256, 256>}, {pipeline_mode = #tpu.pipeline_mode<synchronous>, transform_indices = @transform_1, window_bounds = array<i64: 256, 32>}, {pipeline_mode = #tpu.pipeline_mode<synchronous>, transform_indices = @transform_2, window_bounds = array<i64: 32, 128>}, {pipeline_mode = #tpu.pipeline_mode<synchronous>, transform_indices = @transform_3, window_bounds = array<i64: 1, 128>}, {pipeline_mode = #tpu.pipeline_mode<synchronous>, transform_indices = @transform_4, window_bounds = array<i64: 128, 128>}, {pipeline_mode = #tpu.pipeline_mode<synchronous>, transform_indices = @transform_5, window_bounds = array<i64: 1, 128>}, {pipeline_mode = #tpu.pipeline_mode<synchronous>, transform_indices = @transform_6, window_bounds = array<i64: 256, 128>}, {pipeline_mode = #tpu.pipeline_mode<synchronous>, transform_indices = @transform_7, window_bounds = array<i64: 1, 128>}]} {
    %c0 = arith.constant 0 : index
    %c0_0 = arith.constant 0 : index
    %0 = vector.load %arg2[%c0, %c0_0] : memref<256x32xbf16, #tpu.memory_space<vmem>>, vector<256x32xbf16>
    %1 = arith.extf %0 : vector<256x32xbf16> to vector<256x32xf32>
    %cst = arith.constant dense<0.000000e+00> : vector<256xf32>
    %2 = vector.multi_reduction <add>, %1, %cst [1] : vector<256x32xf32> to vector<256xf32>
    %3 = vector.shape_cast %2 : vector<256xf32> to vector<256x1xf32>
    %cst_1 = arith.constant 0.000000e+00 : f32
    %4 = vector.broadcast %cst_1 : f32 to vector<256x1xf32>
    %5 = arith.cmpf one, %3, %4 : vector<256x1xf32>
    %6 = arith.extui %5 : vector<256x1xi1> to vector<256x1xi32>
    %7 = arith.sitofp %6 : vector<256x1xi32> to vector<256x1xf32>
    %8 = arith.truncf %7 : vector<256x1xf32> to vector<256x1xbf16>
    %9 = vector.broadcast %8 : vector<256x1xbf16> to vector<256x32xbf16>
    %10 = arith.mulf %0, %9 : vector<256x32xbf16>
    %c0_2 = arith.constant 0 : index
    %c0_3 = arith.constant 0 : index
    %11 = vector.load %arg1[%c0_2, %c0_3] : memref<256x256xbf16, #tpu.memory_space<vmem>>, vector<256x256xbf16>
    %c0_4 = arith.constant 0 : index
    %c0_5 = arith.constant 0 : index
    %12 = vector.load %arg3[%c0_4, %c0_5] : memref<32x128xbf16, #tpu.memory_space<vmem>>, vector<32x128xbf16>
    %cst_6 = arith.constant dense<0.000000e+00> : vector<256x128xf32>
    %13 = tpu.matmul %10, %12, %cst_6 {dimension_numbers = #tpu.dot_dimension_numbers<[1], [0], [0], [1], [0, 0, 1, 1], [], []>} : vector<256x32xbf16>, vector<32x128xbf16>, vector<256x128xf32> -> vector<256x128xf32>
    %14 = arith.truncf %13 : vector<256x128xf32> to vector<256x128xbf16>
    %cst_7 = arith.constant dense<0.000000e+00> : vector<256x128xf32>
    %15 = tpu.matmul %11, %14, %cst_7 {dimension_numbers = #tpu.dot_dimension_numbers<[1], [0], [0], [1], [0, 0, 1, 1], [], []>} : vector<256x256xbf16>, vector<256x128xbf16>, vector<256x128xf32> -> vector<256x128xf32>
    %c0_8 = arith.constant 0 : index
    %c0_9 = arith.constant 0 : index
    %16 = vector.load %arg4[%c0_8, %c0_9] : memref<1x128xf32, #tpu.memory_space<vmem>>, vector<1x128xf32>
    %17 = vector.broadcast %16 : vector<1x128xf32> to vector<256x128xf32>
    %18 = arith.addf %15, %17 : vector<256x128xf32>
    %cst_10 = arith.constant 0.000000e+00 : f32
    %19 = vector.broadcast %cst_10 : f32 to vector<256x128xf32>
    %20 = arith.maximumf %18, %19 : vector<256x128xf32>
    %21 = arith.truncf %20 : vector<256x128xf32> to vector<256x128xbf16>
    %c0_11 = arith.constant 0 : index
    %c0_12 = arith.constant 0 : index
    %22 = vector.load %arg5[%c0_11, %c0_12] : memref<128x128xbf16, #tpu.memory_space<vmem>>, vector<128x128xbf16>
    %cst_13 = arith.constant dense<0.000000e+00> : vector<256x128xf32>
    %23 = tpu.matmul %21, %22, %cst_13 {dimension_numbers = #tpu.dot_dimension_numbers<[1], [0], [0], [1], [0, 0, 1, 1], [], []>} : vector<256x128xbf16>, vector<128x128xbf16>, vector<256x128xf32> -> vector<256x128xf32>
    %24 = arith.truncf %23 : vector<256x128xf32> to vector<256x128xbf16>
    %cst_14 = arith.constant dense<0.000000e+00> : vector<256x128xf32>
    %25 = tpu.matmul %11, %24, %cst_14 {dimension_numbers = #tpu.dot_dimension_numbers<[1], [0], [0], [1], [0, 0, 1, 1], [], []>} : vector<256x256xbf16>, vector<256x128xbf16>, vector<256x128xf32> -> vector<256x128xf32>
    %c0_15 = arith.constant 0 : index
    %c0_16 = arith.constant 0 : index
    %26 = vector.load %arg6[%c0_15, %c0_16] : memref<1x128xf32, #tpu.memory_space<vmem>>, vector<1x128xf32>
    %27 = vector.broadcast %26 : vector<1x128xf32> to vector<256x128xf32>
    %28 = arith.addf %25, %27 : vector<256x128xf32>
    %c0_17 = arith.constant 0 : index
    %c0_18 = arith.constant 0 : index
    %29 = vector.load %arg7[%c0_17, %c0_18] : memref<256x128xf32, #tpu.memory_space<vmem>>, vector<256x128xf32>
    tpu.vector_store %arg7[%c0_17, %c0_18], %28 {strides = array<i32>} : memref<256x128xf32, #tpu.memory_space<vmem>>, vector<256x128xf32>,
    %cst_19 = arith.constant dense<0.000000e+00> : vector<128xf32>
    %30 = vector.multi_reduction <add>, %28, %cst_19 [0] : vector<256x128xf32> to vector<128xf32>
    %31 = vector.shape_cast %30 : vector<128xf32> to vector<1x128xf32>
    %cst_20 = arith.constant 3.906250e-03 : f32
    %32 = vector.broadcast %cst_20 : f32 to vector<1x128xf32>
    %33 = arith.mulf %31, %32 : vector<1x128xf32>
    %c0_21 = arith.constant 0 : index
    %c0_22 = arith.constant 0 : index
    %34 = vector.load %arg8[%c0_21, %c0_22] : memref<1x128xf32, #tpu.memory_space<vmem>>, vector<1x128xf32>
    tpu.vector_store %arg8[%c0_21, %c0_22], %33 {strides = array<i32>} : memref<1x128xf32, #tpu.memory_space<vmem>>, vector<1x128xf32>,
    return
  }
  func.func @transform_0(%arg0: i32) -> (i32, i32) {
    %c0_i32 = arith.constant 0 : i32
    %c0_i32_0 = arith.constant 0 : i32
    %c0_i32_1 = arith.constant 0 : i32
    return %c0_i32, %c0_i32_0 : i32, i32
  }
  func.func @transform_1(%arg0: i32) -> (i32, i32) {
    %c0_i32 = arith.constant 0 : i32
    %c0_i32_0 = arith.constant 0 : i32
    %c0_i32_1 = arith.constant 0 : i32
    return %c0_i32, %c0_i32_0 : i32, i32
  }
  func.func @transform_2(%arg0: i32) -> (i32, i32) {
    %c0_i32 = arith.constant 0 : i32
    %c0_i32_0 = arith.constant 0 : i32
    %c0_i32_1 = arith.constant 0 : i32
    return %c0_i32, %c0_i32_0 : i32, i32
  }
  func.func @transform_3(%arg0: i32) -> (i32, i32) {
    %c0_i32 = arith.constant 0 : i32
    %c0_i32_0 = arith.constant 0 : i32
    %c0_i32_1 = arith.constant 0 : i32
    return %c0_i32, %c0_i32_0 : i32, i32
  }
  func.func @transform_4(%arg0: i32) -> (i32, i32) {
    %c0_i32 = arith.constant 0 : i32
    %c0_i32_0 = arith.constant 0 : i32
    %c0_i32_1 = arith.constant 0 : i32
    return %c0_i32, %c0_i32_0 : i32, i32
  }
  func.func @transform_5(%arg0: i32) -> (i32, i32) {
    %c0_i32 = arith.constant 0 : i32
    %c0_i32_0 = arith.constant 0 : i32
    %c0_i32_1 = arith.constant 0 : i32
    return %c0_i32, %c0_i32_0 : i32, i32
  }
  func.func @transform_6(%arg0: i32) -> (i32, i32) {
    %c0_i32 = arith.constant 0 : i32
    %c0_i32_0 = arith.constant 0 : i32
    %c0_i32_1 = arith.constant 0 : i32
    return %c0_i32, %c0_i32_0 : i32, i32
  }
  func.func @transform_7(%arg0: i32) -> (i32, i32) {
    %c0_i32 = arith.constant 0 : i32
    %c0_i32_0 = arith.constant 0 : i32
    %c0_i32_1 = arith.constant 0 : i32
    return %c0_i32, %c0_i32_0 : i32, i32
  }
}

</mosaic_0001>

<llo_original>
// kernel: tpu_custom_call.1
$region0: #{tpu_custom_call.1}
  #allocation0 [shape = 'u32[]', space=smem, size = 0x4, offset = 0x4, fixed_abs, tag = 'smem constant byte address 0x4 - core index']
  #allocation1 [shape = 'u32[144,128]{1,0:T(1,128)}', space=vmem, size = 0x12000, scoped, tag = 'internal scratch']
  %s0 = inlined_call_operand.hbm [shape: bf16[256,256], index: 0, kind: input, shape index: {}]
  %s1 = inlined_call_operand.vmem [shape: bf16[256,32], index: 1, kind: input, shape index: {}]
  %s2 = inlined_call_operand.vmem [shape: bf16[32,128], index: 2, kind: input, shape index: {}]
  %s3 = inlined_call_operand.vmem [shape: f32[1,128], index: 3, kind: input, shape index: {}]
  %s4 = inlined_call_operand.vmem [shape: bf16[128,128], index: 4, kind: input, shape index: {}]
  %s5 = inlined_call_operand.vmem [shape: f32[1,128], index: 5, kind: input, shape index: {}]
  %s6 = inlined_call_operand.hbm [shape: f32[256,128], index: 6, kind: output, shape index: {0}]
  %s7 = inlined_call_operand.hbm [shape: f32[1,128], index: 7, kind: output, shape index: {1}]
  %8 = xla_tuple %s6, %s7
  %s9 = sld [smem:[#allocation0]]
  $region46: #{tpu_custom_call.1} parent=0
    _
  %s11 = ssub.s32 1, %s9
  %s12 = scalar_select 0, %s11, %s9
  $region1: #{tpu_custom_call.1} parent=0
    #allocation2 [shape = 'u8[131072]{0}', space=vmem, size = 0x20000, scoped, tag = 'input window, operand 0, single buffered']
    #allocation3 [shape = 's32[1]{0}', space=sflag, size = 0x4, scoped, tag = 'scoped memory for tpu_custom_call.1']
    #allocation4 [shape = 's32[1]{0}', space=sflag, size = 0x4, scoped, tag = 'scoped memory for tpu_custom_call.1']
    #allocation5 [shape = 'u8[131072]{0}', space=vmem, size = 0x20000, scoped, tag = 'output window, operand 0, single buffered']
    #allocation6 [shape = 'u8[512]{0}', space=vmem, size = 0x400, scoped, tag = 'output window, operand 1, single buffered']
    #allocation7 [shape = 's32[1]{0}', space=sflag, size = 0x4, scoped, tag = 'scoped memory for tpu_custom_call.1']
    %13 = vsyncpa [#allocation3], 0
    %14 = vsyncpa [#allocation4], 0
    %15 = vsyncpa [#allocation7], 0
    // Predicated region
    $region2: #{tpu_custom_call.1} parent=1 // pred_check
      _
    $region3: #{tpu_custom_call.1} parent=1 // pred_check_branch
      %17 = sbr.rel (0) target = $region5
    $region4: #{tpu_custom_call.1} parent=1 // pred_region
      %s19 = ssub.s32 4096, 4096
      %20 = vsyncadd [#allocation3], %s19
      %s21 = sshll.u32 [#allocation2], 4
      %s22 = int_to_ptr.vmem [resolvable:$true] %s21
      %27 = dma.hbm_to_vmem [thread:$0]  %s0, 4096, %s22, [#allocation3], 128, 128, 8
    $region5: #{tpu_custom_call.1} parent=1 // pred_fallthru
      _
    // Predicated region
    $region6: #{tpu_custom_call.1} parent=1 // pred_check
      _
    $region7: #{tpu_custom_call.1} parent=1 // pred_check_branch
      %29 = sbr.rel (0) target = $region9
    $region8: #{tpu_custom_call.1} parent=1 // pred_region
      _
    $region9: #{tpu_custom_call.1} parent=1 // pred_fallthru
      _
    // Predicated region
    $region10: #{tpu_custom_call.1} parent=1 // pred_check
      _
    $region11: #{tpu_custom_call.1} parent=1 // pred_check_branch
      %31 = sbr.rel (0) target = $region13
    $region12: #{tpu_custom_call.1} parent=1 // pred_region
      _
    $region13: #{tpu_custom_call.1} parent=1 // pred_fallthru
      _
    // Predicated region
    $region14: #{tpu_custom_call.1} parent=1 // pred_check
      _
    $region15: #{tpu_custom_call.1} parent=1 // pred_check_branch
      %33 = sbr.rel (0) target = $region17
    $region16: #{tpu_custom_call.1} parent=1 // pred_region
      _
    $region17: #{tpu_custom_call.1} parent=1 // pred_fallthru
      _
    // Predicated region
    $region18: #{tpu_custom_call.1} parent=1 // pred_check
      _
    $region19: #{tpu_custom_call.1} parent=1 // pred_check_branch
      %35 = sbr.rel (0) target = $region21
    $region20: #{tpu_custom_call.1} parent=1 // pred_region
      _
    $region21: #{tpu_custom_call.1} parent=1 // pred_fallthru
      _
    // Predicated region
    $region22: #{tpu_custom_call.1} parent=1 // pred_check
      _
    $region23: #{tpu_custom_call.1} parent=1 // pred_check_branch
      %37 = sbr.rel (0) target = $region25
    $region24: #{tpu_custom_call.1} parent=1 // pred_region
      _
    $region25: #{tpu_custom_call.1} parent=1 // pred_fallthru
      _
    // Predicated region
    $region26: #{tpu_custom_call.1} parent=1 // pred_check
      _
    $region27: #{tpu_custom_call.1} parent=1 // pred_check_branch
      %39 = sbr.rel (0) target = $region29
    $region28: #{tpu_custom_call.1} parent=1 // pred_region
      %40 = dma.done [#allocation3], 4096
    $region29: #{tpu_custom_call.1} parent=1 // pred_fallthru
      _
    %v42 = vld [vmem:[%s1] sm:$0xf]
    %v43 = vld [vmem:[%s1 + $0x4] sm:$0xf]
    %v44 = vld [vmem:[%s1 + $0x8] sm:$0xf]
    %v45 = vld [vmem:[%s1 + $0xc] sm:$0xf]
    %v46 = vld [vmem:[%s1 + $0x10] sm:$0xf]
    %v47 = vld [vmem:[%s1 + $0x14] sm:$0xf]
    %v48 = vld [vmem:[%s1 + $0x18] sm:$0xf]
    %v49 = vld [vmem:[%s1 + $0x1c] sm:$0xf]
    %v50 = vld [vmem:[%s1 + $0x20] sm:$0xf]
    %v51 = vld [vmem:[%s1 + $0x24] sm:$0xf]
    %v52 = vld [vmem:[%s1 + $0x28] sm:$0xf]
    %v53 = vld [vmem:[%s1 + $0x2c] sm:$0xf]
    %v54 = vld [vmem:[%s1 + $0x30] sm:$0xf]
    %v55 = vld [vmem:[%s1 + $0x34] sm:$0xf]
    %v56 = vld [vmem:[%s1 + $0x38] sm:$0xf]
    %v57 = vld [vmem:[%s1 + $0x3c] sm:$0xf]
    %v58 = vld [vmem:[%s1 + $0x40] sm:$0xf]
    %v59 = vld [vmem:[%s1 + $0x44] sm:$0xf]
    %v60 = vld [vmem:[%s1 + $0x48] sm:$0xf]
    %v61 = vld [vmem:[%s1 + $0x4c] sm:$0xf]
    %v62 = vld [vmem:[%s1 + $0x50] sm:$0xf]
    %v63 = vld [vmem:[%s1 + $0x54] sm:$0xf]
    %v64 = vld [vmem:[%s1 + $0x58] sm:$0xf]
    %v65 = vld [vmem:[%s1 + $0x5c] sm:$0xf]
    %v66 = vld [vmem:[%s1 + $0x60] sm:$0xf]
    %v67 = vld [vmem:[%s1 + $0x64] sm:$0xf]
    %v68 = vld [vmem:[%s1 + $0x68] sm:$0xf]
    %v69 = vld [vmem:[%s1 + $0x6c] sm:$0xf]
    %v70 = vld [vmem:[%s1 + $0x70] sm:$0xf]
    %v71 = vld [vmem:[%s1 + $0x74] sm:$0xf]
    %v72 = vld [vmem:[%s1 + $0x78] sm:$0xf]
    %v73 = vld [vmem:[%s1 + $0x7c] sm:$0xf]
    %v74 = vunpack.c.l.bf16 %v42
    %v75 = vunpack.c.l.bf16 %v43
    %v76 = vunpack.c.l.bf16 %v44
    %v77 = vunpack.c.l.bf16 %v45
    %v78 = vunpack.c.l.bf16 %v46
    %v79 = vunpack.c.l.bf16 %v47
    %v80 = vunpack.c.l.bf16 %v48
    %v81 = vunpack.c.l.bf16 %v49
    %v82 = vunpack.c.l.bf16 %v50
    %v83 = vunpack.c.l.bf16 %v51
    %v84 = vunpack.c.l.bf16 %v52
    %v85 = vunpack.c.l.bf16 %v53
    %v86 = vunpack.c.l.bf16 %v54
    %v87 = vunpack.c.l.bf16 %v55
    %v88 = vunpack.c.l.bf16 %v56
    %v89 = vunpack.c.l.bf16 %v57
    %v90 = vunpack.c.l.bf16 %v58
    %v91 = vunpack.c.l.bf16 %v59
    %v92 = vunpack.c.l.bf16 %v60
    %v93 = vunpack.c.l.bf16 %v61
    %v94 = vunpack.c.l.bf16 %v62
    %v95 = vunpack.c.l.bf16 %v63
    %v96 = vunpack.c.l.bf16 %v64
    %v97 = vunpack.c.l.bf16 %v65
    %v98 = vunpack.c.l.bf16 %v66
    %v99 = vunpack.c.l.bf16 %v67
    %v100 = vunpack.c.l.bf16 %v68
    %v101 = vunpack.c.l.bf16 %v69
    %v102 = vunpack.c.l.bf16 %v70
    %v103 = vunpack.c.l.bf16 %v71
    %v104 = vunpack.c.l.bf16 %v72
    %v105 = vunpack.c.l.bf16 %v73
    %vm106 = vcmask 261120
    %v107 = vsel %vm106, %v74, 0.0
    %108 = vadd.xlane.f32.xlu0 %v107
    %v109 = vpop.xlane.xlu0 %108
    %v110 = vsel %vm106, %v75, 0.0
    %111 = vadd.xlane.f32.xlu0 %v110
    %v112 = vpop.xlane.xlu0 %111
    %v113 = vsel %vm106, %v76, 0.0
    %114 = vadd.xlane.f32.xlu0 %v113
    %v115 = vpop.xlane.xlu0 %114
    %v116 = vsel %vm106, %v77, 0.0
    %117 = vadd.xlane.f32.xlu0 %v116
    %v118 = vpop.xlane.xlu0 %117
    %v119 = vsel %vm106, %v78, 0.0
    %120 = vadd.xlane.f32.xlu0 %v119
    %v121 = vpop.xlane.xlu0 %120
    %v122 = vsel %vm106, %v79, 0.0
    %123 = vadd.xlane.f32.xlu0 %v122
    %v124 = vpop.xlane.xlu0 %123
    %v125 = vsel %vm106, %v80, 0.0
    %126 = vadd.xlane.f32.xlu0 %v125
    %v127 = vpop.xlane.xlu0 %126
    %v128 = vsel %vm106, %v81, 0.0
    %129 = vadd.xlane.f32.xlu0 %v128
    %v130 = vpop.xlane.xlu0 %129
    %v131 = vsel %vm106, %v82, 0.0
    %132 = vadd.xlane.f32.xlu0 %v131
    %v133 = vpop.xlane.xlu0 %132
    %v134 = vsel %vm106, %v83, 0.0
    %135 = vadd.xlane.f32.xlu0 %v134
    %v136 = vpop.xlane.xlu0 %135
    %v137 = vsel %vm106, %v84, 0.0
    %138 = vadd.xlane.f32.xlu0 %v137
    %v139 = vpop.xlane.xlu0 %138
    %v140 = vsel %vm106, %v85, 0.0
    %141 = vadd.xlane.f32.xlu0 %v140
    %v142 = vpop.xlane.xlu0 %141
    %v143 = vsel %vm106, %v86, 0.0
    %144 = vadd.xlane.f32.xlu0 %v143
    %v145 = vpop.xlane.xlu0 %144
    %v146 = vsel %vm106, %v87, 0.0
    %147 = vadd.xlane.f32.xlu0 %v146
    %v148 = vpop.xlane.xlu0 %147
    %v149 = vsel %vm106, %v88, 0.0
    %150 = vadd.xlane.f32.xlu0 %v149
    %v151 = vpop.xlane.xlu0 %150
    %v152 = vsel %vm106, %v89, 0.0
    %153 = vadd.xlane.f32.xlu0 %v152
    %v154 = vpop.xlane.xlu0 %153
    %v155 = vsel %vm106, %v90, 0.0
    %156 = vadd.xlane.f32.xlu0 %v155
    %v157 = vpop.xlane.xlu0 %156
    %v158 = vsel %vm106, %v91, 0.0
    %159 = vadd.xlane.f32.xlu0 %v158
    %v160 = vpop.xlane.xlu0 %159
    %v161 = vsel %vm106, %v92, 0.0
    %162 = vadd.xlane.f32.xlu0 %v161
    %v163 = vpop.xlane.xlu0 %162
    %v164 = vsel %vm106, %v93, 0.0
    %165 = vadd.xlane.f32.xlu0 %v164
    %v166 = vpop.xlane.xlu0 %165
    %v167 = vsel %vm106, %v94, 0.0
    %168 = vadd.xlane.f32.xlu0 %v167
    %v169 = vpop.xlane.xlu0 %168
    %v170 = vsel %vm106, %v95, 0.0
    %171 = vadd.xlane.f32.xlu0 %v170
    %v172 = vpop.xlane.xlu0 %171
    %v173 = vsel %vm106, %v96, 0.0
    %174 = vadd.xlane.f32.xlu0 %v173
    %v175 = vpop.xlane.xlu0 %174
    %v176 = vsel %vm106, %v97, 0.0
    %177 = vadd.xlane.f32.xlu0 %v176
    %v178 = vpop.xlane.xlu0 %177
    %v179 = vsel %vm106, %v98, 0.0
    %180 = vadd.xlane.f32.xlu0 %v179
    %v181 = vpop.xlane.xlu0 %180
    %v182 = vsel %vm106, %v99, 0.0
    %183 = vadd.xlane.f32.xlu0 %v182
    %v184 = vpop.xlane.xlu0 %183
    %v185 = vsel %vm106, %v100, 0.0
    %186 = vadd.xlane.f32.xlu0 %v185
    %v187 = vpop.xlane.xlu0 %186
    %v188 = vsel %vm106, %v101, 0.0
    %189 = vadd.xlane.f32.xlu0 %v188
    %v190 = vpop.xlane.xlu0 %189
    %v191 = vsel %vm106, %v102, 0.0
    %192 = vadd.xlane.f32.xlu0 %v191
    %v193 = vpop.xlane.xlu0 %192
    %v194 = vsel %vm106, %v103, 0.0
    %195 = vadd.xlane.f32.xlu0 %v194
    %v196 = vpop.xlane.xlu0 %195
    %v197 = vsel %vm106, %v104, 0.0
    %198 = vadd.xlane.f32.xlu0 %v197
    %v199 = vpop.xlane.xlu0 %198
    %v200 = vsel %vm106, %v105, 0.0
    %201 = vadd.xlane.f32.xlu0 %v200
    %v202 = vpop.xlane.xlu0 %201
    %vm203 = vcmp.ne.f32.partialorder %v109, 0.0
    %vm204 = vcmp.ne.f32.partialorder %v112, 0.0
    %vm205 = vcmp.ne.f32.partialorder %v115, 0.0
    %vm206 = vcmp.ne.f32.partialorder %v118, 0.0
    %vm207 = vcmp.ne.f32.partialorder %v121, 0.0
    %vm208 = vcmp.ne.f32.partialorder %v124, 0.0
    %vm209 = vcmp.ne.f32.partialorder %v127, 0.0
    %vm210 = vcmp.ne.f32.partialorder %v130, 0.0
    %vm211 = vcmp.ne.f32.partialorder %v133, 0.0
    %vm212 = vcmp.ne.f32.partialorder %v136, 0.0
    %vm213 = vcmp.ne.f32.partialorder %v139, 0.0
    %vm214 = vcmp.ne.f32.partialorder %v142, 0.0
    %vm215 = vcmp.ne.f32.partialorder %v145, 0.0
    %vm216 = vcmp.ne.f32.partialorder %v148, 0.0
    %vm217 = vcmp.ne.f32.partialorder %v151, 0.0
    %vm218 = vcmp.ne.f32.partialorder %v154, 0.0
    %vm219 = vcmp.ne.f32.partialorder %v157, 0.0
    %vm220 = vcmp.ne.f32.partialorder %v160, 0.0
    %vm221 = vcmp.ne.f32.partialorder %v163, 0.0
    %vm222 = vcmp.ne.f32.partialorder %v166, 0.0
    %vm223 = vcmp.ne.f32.partialorder %v169, 0.0
    %vm224 = vcmp.ne.f32.partialorder %v172, 0.0
    %vm225 = vcmp.ne.f32.partialorder %v175, 0.0
    %vm226 = vcmp.ne.f32.partialorder %v178, 0.0
    %vm227 = vcmp.ne.f32.partialorder %v181, 0.0
    %vm228 = vcmp.ne.f32.partialorder %v184, 0.0
    %vm229 = vcmp.ne.f32.partialorder %v187, 0.0
    %vm230 = vcmp.ne.f32.partialorder %v190, 0.0
    %vm231 = vcmp.ne.f32.partialorder %v193, 0.0
    %vm232 = vcmp.ne.f32.partialorder %v196, 0.0
    %vm233 = vcmp.ne.f32.partialorder %v199, 0.0
    %vm234 = vcmp.ne.f32.partialorder %v202, 0.0
    %v235 = vsel %vm203, 1, 0
    %v236 = vsel %vm204, 1, 0
    %v237 = vsel %vm205, 1, 0
    %v238 = vsel %vm206, 1, 0
    %v239 = vsel %vm207, 1, 0
    %v240 = vsel %vm208, 1, 0
    %v241 = vsel %vm209, 1, 0
    %v242 = vsel %vm210, 1, 0
    %v243 = vsel %vm211, 1, 0
    %v244 = vsel %vm212, 1, 0
    %v245 = vsel %vm213, 1, 0
    %v246 = vsel %vm214, 1, 0
    %v247 = vsel %vm215, 1, 0
    %v248 = vsel %vm216, 1, 0
    %v249 = vsel %vm217, 1, 0
    %v250 = vsel %vm218, 1, 0
    %v251 = vsel %vm219, 1, 0
    %v252 = vsel %vm220, 1, 0
    %v253 = vsel %vm221, 1, 0
    %v254 = vsel %vm222, 1, 0
    %v255 = vsel %vm223, 1, 0
    %v256 = vsel %vm224, 1, 0
    %v257 = vsel %vm225, 1, 0
    %v258 = vsel %vm226, 1, 0
    %v259 = vsel %vm227, 1, 0
    %v260 = vsel %vm228, 1, 0
    %v261 = vsel %vm229, 1, 0
    %v262 = vsel %vm230, 1, 0
    %v263 = vsel %vm231, 1, 0
    %v264 = vsel %vm232, 1, 0
    %v265 = vsel %vm233, 1, 0
    %v266 = vsel %vm234, 1, 0
    %v267 = vcvt.s32.f32 %v235
    %v268 = vcvt.s32.f32 %v236
    %v269 = vcvt.s32.f32 %v237
    %v270 = vcvt.s32.f32 %v238
    %v271 = vcvt.s32.f32 %v239
    %v272 = vcvt.s32.f32 %v240
    %v273 = vcvt.s32.f32 %v241
    %v274 = vcvt.s32.f32 %v242
    %v275 = vcvt.s32.f32 %v243
    %v276 = vcvt.s32.f32 %v244
    %v277 = vcvt.s32.f32 %v245
    %v278 = vcvt.s32.f32 %v246
    %v279 = vcvt.s32.f32 %v247
    %v280 = vcvt.s32.f32 %v248
    %v281 = vcvt.s32.f32 %v249
    %v282 = vcvt.s32.f32 %v250
    %v283 = vcvt.s32.f32 %v251
    %v284 = vcvt.s32.f32 %v252
    %v285 = vcvt.s32.f32 %v253
    %v286 = vcvt.s32.f32 %v254
    %v287 = vcvt.s32.f32 %v255
    %v288 = vcvt.s32.f32 %v256
    %v289 = vcvt.s32.f32 %v257
    %v290 = vcvt.s32.f32 %v258
    %v291 = vcvt.s32.f32 %v259
    %v292 = vcvt.s32.f32 %v260
    %v293 = vcvt.s32.f32 %v261
    %v294 = vcvt.s32.f32 %v262
    %v295 = vcvt.s32.f32 %v263
    %v296 = vcvt.s32.f32 %v264
    %v297 = vcvt.s32.f32 %v265
    %v298 = vcvt.s32.f32 %v266
    %v299 = vpack.c.bf16 %v268, %v267
    %v300 = vpack.c.bf16 %v270, %v269
    %v301 = vpack.c.bf16 %v272, %v271
    %v302 = vpack.c.bf16 %v274, %v273
    %v303 = vpack.c.bf16 %v276, %v275
    %v304 = vpack.c.bf16 %v278, %v277
    %v305 = vpack.c.bf16 %v280, %v279
    %v306 = vpack.c.bf16 %v282, %v281
    %v307 = vpack.c.bf16 %v284, %v283
    %v308 = vpack.c.bf16 %v286, %v285
    %v309 = vpack.c.bf16 %v288, %v287
    %v310 = vpack.c.bf16 %v290, %v289
    %v311 = vpack.c.bf16 %v292, %v291
    %v312 = vpack.c.bf16 %v294, %v293
    %v313 = vpack.c.bf16 %v296, %v295
    %v314 = vpack.c.bf16 %v298, %v297
    %v332 = vunpack.c.l.s4 839922192
    %v333 = vunpack.c.0.s8 %v332
    %v334 = vlaneseq
    %v335 = vshrl.u32 %v334, 7
    %v336 = vsub.s32 %v333, %v335
    %v337 = vrot.slane %v299, %v336
    %v339 = vunpack.c.l.s4 1985246804
    %v340 = vunpack.c.0.s8 %v339
    %v341 = vlaneseq
    %v342 = vshrl.u32 %v341, 7
    %v343 = vsub.s32 %v340, %v342
    %v344 = vrot.slane %v299, %v343
    %v346 = vunpack.c.l.s4 839922192
    %v347 = vunpack.c.0.s8 %v346
    %v348 = vlaneseq
    %v349 = vshrl.u32 %v348, 7
    %v350 = vsub.s32 %v347, %v349
    %v351 = vrot.slane %v300, %v350
    %v353 = vunpack.c.l.s4 1985246804
    %v354 = vunpack.c.0.s8 %v353
    %v355 = vlaneseq
    %v356 = vshrl.u32 %v355, 7
    %v357 = vsub.s32 %v354, %v356
    %v358 = vrot.slane %v300, %v357
    %v360 = vunpack.c.l.s4 839922192
    %v361 = vunpack.c.0.s8 %v360
    %v362 = vlaneseq
    %v363 = vshrl.u32 %v362, 7
    %v364 = vsub.s32 %v361, %v363
    %v365 = vrot.slane %v301, %v364
    %v367 = vunpack.c.l.s4 1985246804
    %v368 = vunpack.c.0.s8 %v367
    %v369 = vlaneseq
    %v370 = vshrl.u32 %v369, 7
    %v371 = vsub.s32 %v368, %v370
    %v372 = vrot.slane %v301, %v371
    %v374 = vunpack.c.l.s4 839922192
    %v375 = vunpack.c.0.s8 %v374
    %v376 = vlaneseq
    %v377 = vshrl.u32 %v376, 7
    %v378 = vsub.s32 %v375, %v377
    %v379 = vrot.slane %v302, %v378
    %v381 = vunpack.c.l.s4 1985246804
    %v382 = vunpack.c.0.s8 %v381
    %v383 = vlaneseq
    %v384 = vshrl.u32 %v383, 7
    %v385 = vsub.s32 %v382, %v384
    %v386 = vrot.slane %v302, %v385
    %v388 = vunpack.c.l.s4 839922192
    %v389 = vunpack.c.0.s8 %v388
    %v390 = vlaneseq
    %v391 = vshrl.u32 %v390, 7
    %v392 = vsub.s32 %v389, %v391
    %v393 = vrot.slane %v303, %v392
    %v395 = vunpack.c.l.s4 1985246804
    %v396 = vunpack.c.0.s8 %v395
    %v397 = vlaneseq
    %v398 = vshrl.u32 %v397, 7
    %v399 = vsub.s32 %v396, %v398
    %v400 = vrot.slane %v303, %v399
    %v402 = vunpack.c.l.s4 839922192
    %v403 = vunpack.c.0.s8 %v402
    %v404 = vlaneseq
    %v405 = vshrl.u32 %v404, 7
    %v406 = vsub.s32 %v403, %v405
    %v407 = vrot.slane %v304, %v406
    %v409 = vunpack.c.l.s4 1985246804
    %v410 = vunpack.c.0.s8 %v409
    %v411 = vlaneseq
    %v412 = vshrl.u32 %v411, 7
    %v413 = vsub.s32 %v410, %v412
    %v414 = vrot.slane %v304, %v413
    %v416 = vunpack.c.l.s4 839922192
    %v417 = vunpack.c.0.s8 %v416
    %v418 = vlaneseq
    %v419 = vshrl.u32 %v418, 7
    %v420 = vsub.s32 %v417, %v419
    %v421 = vrot.slane %v305, %v420
    %v423 = vunpack.c.l.s4 1985246804
    %v424 = vunpack.c.0.s8 %v423
    %v425 = vlaneseq
    %v426 = vshrl.u32 %v425, 7
    %v427 = vsub.s32 %v424, %v426
    %v428 = vrot.slane %v305, %v427
    %v430 = vunpack.c.l.s4 839922192
    %v431 = vunpack.c.0.s8 %v430
    %v432 = vlaneseq
    %v433 = vshrl.u32 %v432, 7
    %v434 = vsub.s32 %v431, %v433
    %v435 = vrot.slane %v306, %v434
    %v437 = vunpack.c.l.s4 1985246804
    %v438 = vunpack.c.0.s8 %v437
    %v439 = vlaneseq
    %v440 = vshrl.u32 %v439, 7
    %v441 = vsub.s32 %v438, %v440
    %v442 = vrot.slane %v306, %v441
    %v444 = vunpack.c.l.s4 839922192
    %v445 = vunpack.c.0.s8 %v444
    %v446 = vlaneseq
    %v447 = vshrl.u32 %v446, 7
    %v448 = vsub.s32 %v445, %v447
    %v449 = vrot.slane %v307, %v448
    %v451 = vunpack.c.l.s4 1985246804
    %v452 = vunpack.c.0.s8 %v451
    %v453 = vlaneseq
    %v454 = vshrl.u32 %v453, 7
    %v455 = vsub.s32 %v452, %v454
    %v456 = vrot.slane %v307, %v455
    %v458 = vunpack.c.l.s4 839922192
    %v459 = vunpack.c.0.s8 %v458
    %v460 = vlaneseq
    %v461 = vshrl.u32 %v460, 7
    %v462 = vsub.s32 %v459, %v461
    %v463 = vrot.slane %v308, %v462
    %v465 = vunpack.c.l.s4 1985246804
    %v466 = vunpack.c.0.s8 %v465
    %v467 = vlaneseq
    %v468 = vshrl.u32 %v467, 7
    %v469 = vsub.s32 %v466, %v468
    %v470 = vrot.slane %v308, %v469
    %v472 = vunpack.c.l.s4 839922192
    %v473 = vunpack.c.0.s8 %v472
    %v474 = vlaneseq
    %v475 = vshrl.u32 %v474, 7
    %v476 = vsub.s32 %v473, %v475
    %v477 = vrot.slane %v309, %v476
    %v479 = vunpack.c.l.s4 1985246804
    %v480 = vunpack.c.0.s8 %v479
    %v481 = vlaneseq
    %v482 = vshrl.u32 %v481, 7
    %v483 = vsub.s32 %v480, %v482
    %v484 = vrot.slane %v309, %v483
    %v486 = vunpack.c.l.s4 839922192
    %v487 = vunpack.c.0.s8 %v486
    %v488 = vlaneseq
    %v489 = vshrl.u32 %v488, 7
    %v490 = vsub.s32 %v487, %v489
    %v491 = vrot.slane %v310, %v490
    %v493 = vunpack.c.l.s4 1985246804
    %v494 = vunpack.c.0.s8 %v493
    %v495 = vlaneseq
    %v496 = vshrl.u32 %v495, 7
    %v497 = vsub.s32 %v494, %v496
    %v498 = vrot.slane %v310, %v497
    %v500 = vunpack.c.l.s4 839922192
    %v501 = vunpack.c.0.s8 %v500
    %v502 = vlaneseq
    %v503 = vshrl.u32 %v502, 7
    %v504 = vsub.s32 %v501, %v503
    %v505 = vrot.slane %v311, %v504
    %v507 = vunpack.c.l.s4 1985246804
    %v508 = vunpack.c.0.s8 %v507
    %v509 = vlaneseq
    %v510 = vshrl.u32 %v509, 7
    %v511 = vsub.s32 %v508, %v510
    %v512 = vrot.slane %v311, %v511
    %v514 = vunpack.c.l.s4 839922192
    %v515 = vunpack.c.0.s8 %v514
    %v516 = vlaneseq
    %v517 = vshrl.u32 %v516, 7
    %v518 = vsub.s32 %v515, %v517
    %v519 = vrot.slane %v312, %v518
    %v521 = vunpack.c.l.s4 1985246804
    %v522 = vunpack.c.0.s8 %v521
    %v523 = vlaneseq
    %v524 = vshrl.u32 %v523, 7
    %v525 = vsub.s32 %v522, %v524
    %v526 = vrot.slane %v312, %v525
    %v528 = vunpack.c.l.s4 839922192
    %v529 = vunpack.c.0.s8 %v528
    %v530 = vlaneseq
    %v531 = vshrl.u32 %v530, 7
    %v532 = vsub.s32 %v529, %v531
    %v533 = vrot.slane %v313, %v532
    %v535 = vunpack.c.l.s4 1985246804
    %v536 = vunpack.c.0.s8 %v535
    %v537 = vlaneseq
    %v538 = vshrl.u32 %v537, 7
    %v539 = vsub.s32 %v536, %v538
    %v540 = vrot.slane %v313, %v539
    %v542 = vunpack.c.l.s4 839922192
    %v543 = vunpack.c.0.s8 %v542
    %v544 = vlaneseq
    %v545 = vshrl.u32 %v544, 7
    %v546 = vsub.s32 %v543, %v545
    %v547 = vrot.slane %v314, %v546
    %v549 = vunpack.c.l.s4 1985246804
    %v550 = vunpack.c.0.s8 %v549
    %v551 = vlaneseq
    %v552 = vshrl.u32 %v551, 7
    %v553 = vsub.s32 %v550, %v552
    %v554 = vrot.slane %v314, %v553
    %v587 = vmul.bf16 %v42, %v337
    %v588 = vmul.bf16 %v43, %v344
    %v589 = vmul.bf16 %v44, %v351
    %v590 = vmul.bf16 %v45, %v358
    %v591 = vmul.bf16 %v46, %v365
    %v592 = vmul.bf16 %v47, %v372
    %v593 = vmul.bf16 %v48, %v379
    %v594 = vmul.bf16 %v49, %v386
    %v595 = vmul.bf16 %v50, %v393
    %v596 = vmul.bf16 %v51, %v400
    %v597 = vmul.bf16 %v52, %v407
    %v598 = vmul.bf16 %v53, %v414
    %v599 = vmul.bf16 %v54, %v421
    %v600 = vmul.bf16 %v55, %v428
    %v601 = vmul.bf16 %v56, %v435
    %v602 = vmul.bf16 %v57, %v442
    %v603 = vmul.bf16 %v58, %v449
    %v604 = vmul.bf16 %v59, %v456
    %v605 = vmul.bf16 %v60, %v463
    %v606 = vmul.bf16 %v61, %v470
    %v607 = vmul.bf16 %v62, %v477
    %v608 = vmul.bf16 %v63, %v484
    %v609 = vmul.bf16 %v64, %v491
    %v610 = vmul.bf16 %v65, %v498
    %v611 = vmul.bf16 %v66, %v505
    %v612 = vmul.bf16 %v67, %v512
    %v613 = vmul.bf16 %v68, %v519
    %v614 = vmul.bf16 %v69, %v526
    %v615 = vmul.bf16 %v70, %v533
    %v616 = vmul.bf16 %v71, %v540
    %v617 = vmul.bf16 %v72, %v547
    %v618 = vmul.bf16 %v73, %v554
    %v619 = vld [vmem:[#allocation2] sm:$0xff]
    %v620 = vld [vmem:[#allocation2 + $0x8] sm:$0xff]
    %v621 = vld [vmem:[#allocation2 + $0x10] sm:$0xff]
    %v622 = vld [vmem:[#allocation2 + $0x18] sm:$0xff]
    %v623 = vld [vmem:[#allocation2 + $0x20] sm:$0xff]
    %v624 = vld [vmem:[#allocation2 + $0x28] sm:$0xff]
    %v625 = vld [vmem:[#allocation2 + $0x30] sm:$0xff]
    %v626 = vld [vmem:[#allocation2 + $0x38] sm:$0xff]
    %v627 = vld [vmem:[#allocation2 + $0x40] sm:$0xff]
    %v628 = vld [vmem:[#allocation2 + $0x48] sm:$0xff]
    %v629 = vld [vmem:[#allocation2 + $0x50] sm:$0xff]
    %v630 = vld [vmem:[#allocation2 + $0x58] sm:$0xff]
    %v631 = vld [vmem:[#allocation2 + $0x60] sm:$0xff]
    %v632 = vld [vmem:[#allocation2 + $0x68] sm:$0xff]
    %v633 = vld [vmem:[#allocation2 + $0x70] sm:$0xff]
    %v634 = vld [vmem:[#allocation2 + $0x78] sm:$0xff]
    %v635 = vld [vmem:[#allocation2 + $0x80] sm:$0xff]
    %v636 = vld [vmem:[#allocation2 + $0x88] sm:$0xff]
    %v637 = vld [vmem:[#allocation2 + $0x90] sm:$0xff]
    %v638 = vld [vmem:[#allocation2 + $0x98] sm:$0xff]
    %v639 = vld [vmem:[#allocation2 + $0xa0] sm:$0xff]
    %v640 = vld [vmem:[#allocation2 + $0xa8] sm:$0xff]
    %v641 = vld [vmem:[#allocation2 + $0xb0] sm:$0xff]
    %v642 = vld [vmem:[#allocation2 + $0xb8] sm:$0xff]
    %v643 = vld [vmem:[#allocation2 + $0xc0] sm:$0xff]
    %v644 = vld [vmem:[#allocation2 + $0xc8] sm:$0xff]
    %v645 = vld [vmem:[#allocation2 + $0xd0] sm:$0xff]
    %v646 = vld [vmem:[#allocation2 + $0xd8] sm:$0xff]
    %v647 = vld [vmem:[#allocation2 + $0xe0] sm:$0xff]
    %v648 = vld [vmem:[#allocation2 + $0xe8] sm:$0xff]
    %v649 = vld [vmem:[#allocation2 + $0xf0] sm:$0xff]
    %v650 = vld [vmem:[#allocation2 + $0xf8] sm:$0xff]
    %v651 = vld [vmem:[%s2] sm:$0xf]
    %v652 = vld [vmem:[%s2 + $0x4] sm:$0xf]
    %v653 = vld [vmem:[%s2 + $0x8] sm:$0xf]
    %v654 = vld [vmem:[%s2 + $0xc] sm:$0xf]
    %v687 = vunpack.c.l.b16 %v587
    %v688 = vunpack.c.l.b16 %v588
    %v689 = vunpack.c.l.b16 %v589
    %v690 = vunpack.c.l.b16 %v590
    %v691 = vunpack.c.l.b16 %v591
    %v692 = vunpack.c.l.b16 %v592
    %v693 = vunpack.c.l.b16 %v593
    %v694 = vunpack.c.l.b16 %v594
    %v695 = vunpack.c.l.b16 %v595
    %v696 = vunpack.c.l.b16 %v596
    %v697 = vunpack.c.l.b16 %v597
    %v698 = vunpack.c.l.b16 %v598
    %v699 = vunpack.c.l.b16 %v599
    %v700 = vunpack.c.l.b16 %v600
    %v701 = vunpack.c.l.b16 %v601
    %v702 = vunpack.c.l.b16 %v602
    %v703 = vunpack.c.l.b16 %v603
    %v704 = vunpack.c.l.b16 %v604
    %v705 = vunpack.c.l.b16 %v605
    %v706 = vunpack.c.l.b16 %v606
    %v707 = vunpack.c.l.b16 %v607
    %v708 = vunpack.c.l.b16 %v608
    %v709 = vunpack.c.l.b16 %v609
    %v710 = vunpack.c.l.b16 %v610
    %v711 = vunpack.c.l.b16 %v611
    %v712 = vunpack.c.l.b16 %v612
    %v713 = vunpack.c.l.b16 %v613
    %v714 = vunpack.c.l.b16 %v614
    %v715 = vunpack.c.l.b16 %v615
    %v716 = vunpack.c.l.b16 %v616
    %v717 = vunpack.c.l.b16 %v617
    %v718 = vunpack.c.l.b16 %v618
    %v719 = vpack.c.b16 %v688, %v687
    %v720 = vpack.c.b16 %v690, %v689
    %v721 = vpack.c.b16 %v692, %v691
    %v722 = vpack.c.b16 %v694, %v693
    %v723 = vpack.c.b16 %v696, %v695
    %v724 = vpack.c.b16 %v698, %v697
    %v725 = vpack.c.b16 %v700, %v699
    %v726 = vpack.c.b16 %v702, %v701
    %v727 = vpack.c.b16 %v704, %v703
    %v728 = vpack.c.b16 %v706, %v705
    %v729 = vpack.c.b16 %v708, %v707
    %v730 = vpack.c.b16 %v710, %v709
    %v731 = vpack.c.b16 %v712, %v711
    %v732 = vpack.c.b16 %v714, %v713
    %v733 = vpack.c.b16 %v716, %v715
    %v734 = vpack.c.b16 %v718, %v717
    %v739 = vunpack.c.l.b16 %v651
    %v740 = vunpack.c.l.b16 %v652
    %v741 = vunpack.c.l.b16 %v653
    %v742 = vunpack.c.l.b16 %v654
    %v743 = vpack.c.b16 %v740, %v739
    %v744 = vpack.c.b16 %v742, %v741
    %v748 = vsel %vm106, %v719, 0
    %v751 = vsel %vm106, %v720, 0
    %v754 = vsel %vm106, %v721, 0
    %v757 = vsel %vm106, %v722, 0
    %v760 = vsel %vm106, %v723, 0
    %v763 = vsel %vm106, %v724, 0
    %v766 = vsel %vm106, %v725, 0
    %v769 = vsel %vm106, %v726, 0
    %v772 = vsel %vm106, %v727, 0
    %v775 = vsel %vm106, %v728, 0
    %v778 = vsel %vm106, %v729, 0
    %v781 = vsel %vm106, %v730, 0
    %v784 = vsel %vm106, %v731, 0
    %v787 = vsel %vm106, %v732, 0
    %v790 = vsel %vm106, %v733, 0
    %v793 = vsel %vm106, %v734, 0
    %795 = vmatprep.subr.bf16.mxu0 0
    %796 = vmatpush1.bf16.msra.mxu0 %v743
    %797 = vmatprep.subr.bf16.mxu0 0
    %798 = vmatpush1.bf16.msra.mxu0 %v744
    %799 = vmatprep.subr.bf16.mxu0 0
    %800 = vmatpush1.bf16.msra.mxu0 0
    %801 = vmatprep.subr.bf16.mxu0 0
    %802 = vmatpush1.bf16.msra.mxu0 0
    %803 = vmatprep.subr.bf16.mxu0 0
    %804 = vmatpush1.bf16.msra.mxu0 0
    %805 = vmatprep.subr.bf16.mxu0 0
    %806 = vmatpush1.bf16.msra.mxu0 0
    %807 = vmatprep.subr.bf16.mxu0 0
    %808 = vmatpush1.bf16.msra.mxu0 0
    %809 = vmatprep.subr.bf16.mxu0 0
    %810 = vmatpush1.bf16.msra.mxu0 0
    %811 = vmatprep.subr.bf16.mxu0 0
    %812 = vmatpush1.bf16.msra.mxu0 0
    %813 = vmatprep.subr.bf16.mxu0 0
    %814 = vmatpush1.bf16.msra.mxu0 0
    %815 = vmatprep.subr.bf16.mxu0 0
    %816 = vmatpush1.bf16.msra.mxu0 0
    %817 = vmatprep.subr.bf16.mxu0 0
    %818 = vmatpush1.bf16.msra.mxu0 0
    %819 = vmatprep.subr.bf16.mxu0 0
    %820 = vmatpush1.bf16.msra.mxu0 0
    %821 = vmatprep.subr.bf16.mxu0 0
    %822 = vmatpush1.bf16.msra.mxu0 0
    %823 = vmatprep.subr.bf16.mxu0 0
    %824 = vmatpush1.bf16.msra.mxu0 0
    %825 = vmatprep.subr.bf16.mxu0 0
    %826 = vmatpush1.bf16.msra.mxu0 0
    %827 = vmatprep.mubr.bf16.mxu0 0
    %828 = vmatmul.mubr.bf16.gmra.mrb[0].mxu0 %v748
    %v829 = vpop.f32.mrb[0].mxu0
    %v830 = vadd.f32 0.0, %v829
    %v831 = vpop.f32.mrb[0].mxu0
    %v832 = vpop.f32.mrb[0].mxu0
    %v833 = vadd.f32 0.0, %v832
    %v834 = vpop.f32.mrb[0].mxu0
    %835 = vmatprep.mubr.bf16.mxu0 0
    %836 = vmatmul.mubr.bf16.gmra.mrb[0].mxu0 %v751
    %v837 = vpop.f32.mrb[0].mxu0
    %v838 = vadd.f32 0.0, %v837
    %v839 = vpop.f32.mrb[0].mxu0
    %v840 = vpop.f32.mrb[0].mxu0
    %v841 = vadd.f32 0.0, %v840
    %v842 = vpop.f32.mrb[0].mxu0
    %843 = vmatprep.mubr.bf16.mxu0 0
    %844 = vmatmul.mubr.bf16.gmra.mrb[0].mxu0 %v754
    %v845 = vpop.f32.mrb[0].mxu0
    %v846 = vadd.f32 0.0, %v845
    %v847 = vpop.f32.mrb[0].mxu0
    %v848 = vpop.f32.mrb[0].mxu0
    %v849 = vadd.f32 0.0, %v848
    %v850 = vpop.f32.mrb[0].mxu0
    %851 = vmatprep.mubr.bf16.mxu0 0
    %852 = vmatmul.mubr.bf16.gmra.mrb[0].mxu0 %v757
    %v853 = vpop.f32.mrb[0].mxu0
    %v854 = vadd.f32 0.0, %v853
    %v855 = vpop.f32.mrb[0].mxu0
    %v856 = vpop.f32.mrb[0].mxu0
    %v857 = vadd.f32 0.0, %v856
    %v858 = vpop.f32.mrb[0].mxu0
    %859 = vmatprep.mubr.bf16.mxu0 0
    %860 = vmatmul.mubr.bf16.gmra.mrb[0].mxu0 %v760
    %v861 = vpop.f32.mrb[0].mxu0
    %v862 = vadd.f32 0.0, %v861
    %v863 = vpop.f32.mrb[0].mxu0
    %v864 = vpop.f32.mrb[0].mxu0
    %v865 = vadd.f32 0.0, %v864
    %v866 = vpop.f32.mrb[0].mxu0
    %867 = vmatprep.mubr.bf16.mxu0 0
    %868 = vmatmul.mubr.bf16.gmra.mrb[0].mxu0 %v763
    %v869 = vpop.f32.mrb[0].mxu0
    %v870 = vadd.f32 0.0, %v869
    %v871 = vpop.f32.mrb[0].mxu0
    %v872 = vpop.f32.mrb[0].mxu0
    %v873 = vadd.f32 0.0, %v872
    %v874 = vpop.f32.mrb[0].mxu0
    %875 = vmatprep.mubr.bf16.mxu0 0
    %876 = vmatmul.mubr.bf16.gmra.mrb[0].mxu0 %v766
    %v877 = vpop.f32.mrb[0].mxu0
    %v878 = vadd.f32 0.0, %v877
    %v879 = vpop.f32.mrb[0].mxu0
    %v880 = vpop.f32.mrb[0].mxu0
    %v881 = vadd.f32 0.0, %v880
    %v882 = vpop.f32.mrb[0].mxu0
    %883 = vmatprep.mubr.bf16.mxu0 0
    %884 = vmatmul.mubr.bf16.gmra.mrb[0].mxu0 %v769
    %v885 = vpop.f32.mrb[0].mxu0
    %v886 = vadd.f32 0.0, %v885
    %v887 = vpop.f32.mrb[0].mxu0
    %v888 = vpop.f32.mrb[0].mxu0
    %v889 = vadd.f32 0.0, %v888
    %v890 = vpop.f32.mrb[0].mxu0
    %891 = vmatprep.mubr.bf16.mxu0 0
    %892 = vmatmul.mubr.bf16.gmra.mrb[0].mxu0 %v772
    %v893 = vpop.f32.mrb[0].mxu0
    %v894 = vadd.f32 0.0, %v893
    %v895 = vpop.f32.mrb[0].mxu0
    %v896 = vpop.f32.mrb[0].mxu0
    %v897 = vadd.f32 0.0, %v896
    %v898 = vpop.f32.mrb[0].mxu0
    %899 = vmatprep.mubr.bf16.mxu0 0
    %900 = vmatmul.mubr.bf16.gmra.mrb[0].mxu0 %v775
    %v901 = vpop.f32.mrb[0].mxu0
    %v902 = vadd.f32 0.0, %v901
    %v903 = vpop.f32.mrb[0].mxu0
    %v904 = vpop.f32.mrb[0].mxu0
    %v905 = vadd.f32 0.0, %v904
    %v906 = vpop.f32.mrb[0].mxu0
    %907 = vmatprep.mubr.bf16.mxu0 0
    %908 = vmatmul.mubr.bf16.gmra.mrb[0].mxu0 %v778
    %v909 = vpop.f32.mrb[0].mxu0
    %v910 = vadd.f32 0.0, %v909
    %v911 = vpop.f32.mrb[0].mxu0
    %v912 = vpop.f32.mrb[0].mxu0
    %v913 = vadd.f32 0.0, %v912
    %v914 = vpop.f32.mrb[0].mxu0
    %915 = vmatprep.mubr.bf16.mxu0 0
    %916 = vmatmul.mubr.bf16.gmra.mrb[0].mxu0 %v781
    %v917 = vpop.f32.mrb[0].mxu0
    %v918 = vadd.f32 0.0, %v917
    %v919 = vpop.f32.mrb[0].mxu0
    %v920 = vpop.f32.mrb[0].mxu0
    %v921 = vadd.f32 0.0, %v920
    %v922 = vpop.f32.mrb[0].mxu0
    %923 = vmatprep.mubr.bf16.mxu0 0
    %924 = vmatmul.mubr.bf16.gmra.mrb[0].mxu0 %v784
    %v925 = vpop.f32.mrb[0].mxu0
    %v926 = vadd.f32 0.0, %v925
    %v927 = vpop.f32.mrb[0].mxu0
    %v928 = vpop.f32.mrb[0].mxu0
    %v929 = vadd.f32 0.0, %v928
    %v930 = vpop.f32.mrb[0].mxu0
    %931 = vmatprep.mubr.bf16.mxu0 0
    %932 = vmatmul.mubr.bf16.gmra.mrb[0].mxu0 %v787
    %v933 = vpop.f32.mrb[0].mxu0
    %v934 = vadd.f32 0.0, %v933
    %v935 = vpop.f32.mrb[0].mxu0
    %v936 = vpop.f32.mrb[0].mxu0
    %v937 = vadd.f32 0.0, %v936
    %v938 = vpop.f32.mrb[0].mxu0
    %939 = vmatprep.mubr.bf16.mxu0 0
    %940 = vmatmul.mubr.bf16.gmra.mrb[0].mxu0 %v790
    %v941 = vpop.f32.mrb[0].mxu0
    %v942 = vadd.f32 0.0, %v941
    %v943 = vpop.f32.mrb[0].mxu0
    %v944 = vpop.f32.mrb[0].mxu0
    %v945 = vadd.f32 0.0, %v944
    %v946 = vpop.f32.mrb[0].mxu0
    %947 = vmatprep.mubr.bf16.mxu0 0
    %948 = vmatmul.mubr.bf16.gmra.mrb[0].mxu0 %v793
    %v949 = vpop.f32.mrb[0].mxu0
    %v950 = vadd.f32 0.0, %v949
    %v951 = vpop.f32.mrb[0].mxu0
    %v952 = vpop.f32.mrb[0].mxu0
    %v953 = vadd.f32 0.0, %v952
    %v954 = vpop.f32.mrb[0].mxu0
    %955 = vdwg.mxu0
    %v956 = vpack.c.bf16 %v833, %v830
    %v957 = vpack.c.bf16 %v841, %v838
    %v958 = vpack.c.bf16 %v849, %v846
    %v959 = vpack.c.bf16 %v857, %v854
    %v960 = vpack.c.bf16 %v865, %v862
    %v961 = vpack.c.bf16 %v873, %v870
    %v962 = vpack.c.bf16 %v881, %v878
    %v963 = vpack.c.bf16 %v889, %v886
    %v964 = vpack.c.bf16 %v897, %v894
    %v965 = vpack.c.bf16 %v905, %v902
    %v966 = vpack.c.bf16 %v913, %v910
    %v967 = vpack.c.bf16 %v921, %v918
    %v968 = vpack.c.bf16 %v929, %v926
    %v969 = vpack.c.bf16 %v937, %v934
    %v970 = vpack.c.bf16 %v945, %v942
    %v971 = vpack.c.bf16 %v953, %v950
    %v972 = vld [vmem:[%s3] sm:$0x1]
    %v974 = vlaneseq
    %v975 = vshrl.u32 %v974, 7
    %v976 = vsub.s32 0, %v975
    %v977 = vrot.slane %v972, %v976
    %v1011 = vunpack.c.l.b16 %v619
    %v1012 = vunpack.c.h.b16 %v619
    %v1013 = vunpack.c.l.b16 %v620
    %v1014 = vunpack.c.h.b16 %v620
    %v1015 = vunpack.c.l.b16 %v621
    %v1016 = vunpack.c.h.b16 %v621
    %v1017 = vunpack.c.l.b16 %v622
    %v1018 = vunpack.c.h.b16 %v622
    %v1019 = vunpack.c.l.b16 %v623
    %v1020 = vunpack.c.h.b16 %v623
    %v1021 = vunpack.c.l.b16 %v624
    %v1022 = vunpack.c.h.b16 %v624
    %v1023 = vunpack.c.l.b16 %v625
    %v1024 = vunpack.c.h.b16 %v625
    %v1025 = vunpack.c.l.b16 %v626
    %v1026 = vunpack.c.h.b16 %v626
    %v1027 = vunpack.c.l.b16 %v627
    %v1028 = vunpack.c.h.b16 %v627
    %v1029 = vunpack.c.l.b16 %v628
    %v1030 = vunpack.c.h.b16 %v628
    %v1031 = vunpack.c.l.b16 %v629
    %v1032 = vunpack.c.h.b16 %v629
    %v1033 = vunpack.c.l.b16 %v630
    %v1034 = vunpack.c.h.b16 %v630
    %v1035 = vunpack.c.l.b16 %v631
    %v1036 = vunpack.c.h.b16 %v631
    %v1037 = vunpack.c.l.b16 %v632
    %v1038 = vunpack.c.h.b16 %v632
    %v1039 = vunpack.c.l.b16 %v633
    %v1040 = vunpack.c.h.b16 %v633
    %v1041 = vunpack.c.l.b16 %v634
    %v1042 = vunpack.c.h.b16 %v634
    %v1043 = vunpack.c.l.b16 %v635
    %v1044 = vunpack.c.h.b16 %v635
    %v1045 = vunpack.c.l.b16 %v636
    %v1046 = vunpack.c.h.b16 %v636
    %v1047 = vunpack.c.l.b16 %v637
    %v1048 = vunpack.c.h.b16 %v637
    %v1049 = vunpack.c.l.b16 %v638
    %v1050 = vunpack.c.h.b16 %v638
    %v1051 = vunpack.c.l.b16 %v639
    %v1052 = vunpack.c.h.b16 %v639
    %v1053 = vunpack.c.l.b16 %v640
    %v1054 = vunpack.c.h.b16 %v640
    %v1055 = vunpack.c.l.b16 %v641
    %v1056 = vunpack.c.h.b16 %v641
    %v1057 = vunpack.c.l.b16 %v642
    %v1058 = vunpack.c.h.b16 %v642
    %v1059 = vunpack.c.l.b16 %v643
    %v1060 = vunpack.c.h.b16 %v643
    %v1061 = vunpack.c.l.b16 %v644
    %v1062 = vunpack.c.h.b16 %v644
    %v1063 = vunpack.c.l.b16 %v645
    %v1064 = vunpack.c.h.b16 %v645
    %v1065 = vunpack.c.l.b16 %v646
    %v1066 = vunpack.c.h.b16 %v646
    %v1067 = vunpack.c.l.b16 %v647
    %v1068 = vunpack.c.h.b16 %v647
    %v1069 = vunpack.c.l.b16 %v648
    %v1070 = vunpack.c.h.b16 %v648
    %v1071 = vunpack.c.l.b16 %v649
    %v1072 = vunpack.c.h.b16 %v649
    %v1073 = vunpack.c.l.b16 %v650
    %v1074 = vunpack.c.h.b16 %v650
    %v1075 = vpack.c.b16 %v1013, %v1011
    %v1076 = vpack.c.b16 %v1014, %v1012
    %v1077 = vpack.c.b16 %v1017, %v1015
    %v1078 = vpack.c.b16 %v1018, %v1016
    %v1079 = vpack.c.b16 %v1021, %v1019
    %v1080 = vpack.c.b16 %v1022, %v1020
    %v1081 = vpack.c.b16 %v1025, %v1023
    %v1082 = vpack.c.b16 %v1026, %v1024
    %v1083 = vpack.c.b16 %v1029, %v1027
    %v1084 = vpack.c.b16 %v1030, %v1028
    %v1085 = vpack.c.b16 %v1033, %v1031
    %v1086 = vpack.c.b16 %v1034, %v1032
    %v1087 = vpack.c.b16 %v1037, %v1035
    %v1088 = vpack.c.b16 %v1038, %v1036
    %v1089 = vpack.c.b16 %v1041, %v1039
    %v1090 = vpack.c.b16 %v1042, %v1040
    %v1091 = vpack.c.b16 %v1045, %v1043
    %v1092 = vpack.c.b16 %v1046, %v1044
    %v1093 = vpack.c.b16 %v1049, %v1047
    %v1094 = vpack.c.b16 %v1050, %v1048
    %v1095 = vpack.c.b16 %v1053, %v1051
    %v1096 = vpack.c.b16 %v1054, %v1052
    %v1097 = vpack.c.b16 %v1057, %v1055
    %v1098 = vpack.c.b16 %v1058, %v1056
    %v1099 = vpack.c.b16 %v1061, %v1059
    %v1100 = vpack.c.b16 %v1062, %v1060
    %v1101 = vpack.c.b16 %v1065, %v1063
    %v1102 = vpack.c.b16 %v1066, %v1064
    %v1103 = vpack.c.b16 %v1069, %v1067
    %v1104 = vpack.c.b16 %v1070, %v1068
    %v1105 = vpack.c.b16 %v1073, %v1071
    %v1106 = vpack.c.b16 %v1074, %v1072
    %1139 = vmatprep.subr.bf16.mxu0 0
    %1140 = vmatpush1.bf16.msra.mxu0 %v956
    %1141 = vmatprep.subr.bf16.mxu0 0
    %1142 = vmatpush1.bf16.msra.mxu0 %v957
    %1143 = vmatprep.subr.bf16.mxu0 0
    %1144 = vmatpush1.bf16.msra.mxu0 %v958
    %1145 = vmatprep.subr.bf16.mxu0 0
    %1146 = vmatpush1.bf16.msra.mxu0 %v959
    %1147 = vmatprep.subr.bf16.mxu0 0
    %1148 = vmatpush1.bf16.msra.mxu0 %v960
    %1149 = vmatprep.subr.bf16.mxu0 0
    %1150 = vmatpush1.bf16.msra.mxu0 %v961
    %1151 = vmatprep.subr.bf16.mxu0 0
    %1152 = vmatpush1.bf16.msra.mxu0 %v962
    %1153 = vmatprep.subr.bf16.mxu0 0
    %1154 = vmatpush1.bf16.msra.mxu0 %v963
    %1155 = vmatprep.subr.bf16.mxu0 0
    %1156 = vmatpush1.bf16.msra.mxu0 %v964
    %1157 = vmatprep.subr.bf16.mxu0 0
    %1158 = vmatpush1.bf16.msra.mxu0 %v965
    %1159 = vmatprep.subr.bf16.mxu0 0
    %1160 = vmatpush1.bf16.msra.mxu0 %v966
    %1161 = vmatprep.subr.bf16.mxu0 0
    %1162 = vmatpush1.bf16.msra.mxu0 %v967
    %1163 = vmatprep.subr.bf16.mxu0 0
    %1164 = vmatpush1.bf16.msra.mxu0 %v968
    %1165 = vmatprep.subr.bf16.mxu0 0
    %1166 = vmatpush1.bf16.msra.mxu0 %v969
    %1167 = vmatprep.subr.bf16.mxu0 0
    %1168 = vmatpush1.bf16.msra.mxu0 %v970
    %1169 = vmatprep.subr.bf16.mxu0 0
    %1170 = vmatpush1.bf16.msra.mxu0 %v971
    %1171 = vmatprep.mubr.bf16.mxu0 %v1076
    %1172 = vmatmul.mubr.bf16.gmra.mrb[0].mxu0 %v1075
    %v1173 = vpop.f32.mrb[0].mxu0
    %v1174 = vadd.f32 %v977, %v1173
    %v1175 = vpop.f32.mrb[0].mxu0
    %v1176 = vpop.f32.mrb[0].mxu0
    %v1177 = vadd.f32 %v977, %v1176
    %v1178 = vpop.f32.mrb[0].mxu0
    %1179 = vmatprep.mubr.bf16.mxu0 %v1078
    %1180 = vmatmul.mubr.bf16.gmra.mrb[0].mxu0 %v1077
    %v1181 = vpop.f32.mrb[0].mxu0
    %v1182 = vadd.f32 %v977, %v1181
    %v1183 = vpop.f32.mrb[0].mxu0
    %v1184 = vpop.f32.mrb[0].mxu0
    %v1185 = vadd.f32 %v977, %v1184
    %v1186 = vpop.f32.mrb[0].mxu0
    %1187 = vmatprep.mubr.bf16.mxu0 %v1080
    %1188 = vmatmul.mubr.bf16.gmra.mrb[0].mxu0 %v1079
    %v1189 = vpop.f32.mrb[0].mxu0
    %v1190 = vadd.f32 %v977, %v1189
    %v1191 = vpop.f32.mrb[0].mxu0
    %v1192 = vpop.f32.mrb[0].mxu0
    %v1193 = vadd.f32 %v977, %v1192
    %v1194 = vpop.f32.mrb[0].mxu0
    %1195 = vmatprep.mubr.bf16.mxu0 %v1082
    %1196 = vmatmul.mubr.bf16.gmra.mrb[0].mxu0 %v1081
    %v1197 = vpop.f32.mrb[0].mxu0
    %v1198 = vadd.f32 %v977, %v1197
    %v1199 = vpop.f32.mrb[0].mxu0
    %v1200 = vpop.f32.mrb[0].mxu0
    %v1201 = vadd.f32 %v977, %v1200
    %v1202 = vpop.f32.mrb[0].mxu0
    %1203 = vmatprep.mubr.bf16.mxu0 %v1084
    %1204 = vmatmul.mubr.bf16.gmra.mrb[0].mxu0 %v1083
    %v1205 = vpop.f32.mrb[0].mxu0
    %v1206 = vadd.f32 %v977, %v1205
    %v1207 = vpop.f32.mrb[0].mxu0
    %v1208 = vpop.f32.mrb[0].mxu0
    %v1209 = vadd.f32 %v977, %v1208
    %v1210 = vpop.f32.mrb[0].mxu0
    %1211 = vmatprep.mubr.bf16.mxu0 %v1086
    %1212 = vmatmul.mubr.bf16.gmra.mrb[0].mxu0 %v1085
    %v1213 = vpop.f32.mrb[0].mxu0
    %v1214 = vadd.f32 %v977, %v1213
    %v1215 = vpop.f32.mrb[0].mxu0
    %v1216 = vpop.f32.mrb[0].mxu0
    %v1217 = vadd.f32 %v977, %v1216
    %v1218 = vpop.f32.mrb[0].mxu0
    %1219 = vmatprep.mubr.bf16.mxu0 %v1088
    %1220 = vmatmul.mubr.bf16.gmra.mrb[0].mxu0 %v1087
    %v1221 = vpop.f32.mrb[0].mxu0
    %v1222 = vadd.f32 %v977, %v1221
    %v1223 = vpop.f32.mrb[0].mxu0
    %v1224 = vpop.f32.mrb[0].mxu0
    %v1225 = vadd.f32 %v977, %v1224
    %v1226 = vpop.f32.mrb[0].mxu0
    %1227 = vmatprep.mubr.bf16.mxu0 %v1090
    %1228 = vmatmul.mubr.bf16.gmra.mrb[0].mxu0 %v1089
    %v1229 = vpop.f32.mrb[0].mxu0
    %v1230 = vadd.f32 %v977, %v1229
    %v1231 = vpop.f32.mrb[0].mxu0
    %v1232 = vpop.f32.mrb[0].mxu0
    %v1233 = vadd.f32 %v977, %v1232
    %v1234 = vpop.f32.mrb[0].mxu0
    %1235 = vmatprep.mubr.bf16.mxu0 %v1092
    %1236 = vmatmul.mubr.bf16.gmra.mrb[0].mxu0 %v1091
    %v1237 = vpop.f32.mrb[0].mxu0
    %v1238 = vadd.f32 %v977, %v1237
    %v1239 = vpop.f32.mrb[0].mxu0
    %v1240 = vpop.f32.mrb[0].mxu0
    %v1241 = vadd.f32 %v977, %v1240
    %v1242 = vpop.f32.mrb[0].mxu0
    %1243 = vmatprep.mubr.bf16.mxu0 %v1094
    %1244 = vmatmul.mubr.bf16.gmra.mrb[0].mxu0 %v1093
    %v1245 = vpop.f32.mrb[0].mxu0
    %v1246 = vadd.f32 %v977, %v1245
    %v1247 = vpop.f32.mrb[0].mxu0
    %v1248 = vpop.f32.mrb[0].mxu0
    %v1249 = vadd.f32 %v977, %v1248
    %v1250 = vpop.f32.mrb[0].mxu0
    %1251 = vmatprep.mubr.bf16.mxu0 %v1096
    %1252 = vmatmul.mubr.bf16.gmra.mrb[0].mxu0 %v1095
    %v1253 = vpop.f32.mrb[0].mxu0
    %v1254 = vadd.f32 %v977, %v1253
    %v1255 = vpop.f32.mrb[0].mxu0
    %v1256 = vpop.f32.mrb[0].mxu0
    %v1257 = vadd.f32 %v977, %v1256
    %v1258 = vpop.f32.mrb[0].mxu0
    %1259 = vmatprep.mubr.bf16.mxu0 %v1098
    %1260 = vmatmul.mubr.bf16.gmra.mrb[0].mxu0 %v1097
    %v1261 = vpop.f32.mrb[0].mxu0
    %v1262 = vadd.f32 %v977, %v1261
    %v1263 = vpop.f32.mrb[0].mxu0
    %v1264 = vpop.f32.mrb[0].mxu0
    %v1265 = vadd.f32 %v977, %v1264
    %v1266 = vpop.f32.mrb[0].mxu0
    %1267 = vmatprep.mubr.bf16.mxu0 %v1100
    %1268 = vmatmul.mubr.bf16.gmra.mrb[0].mxu0 %v1099
    %v1269 = vpop.f32.mrb[0].mxu0
    %v1270 = vadd.f32 %v977, %v1269
    %v1271 = vpop.f32.mrb[0].mxu0
    %v1272 = vpop.f32.mrb[0].mxu0
    %v1273 = vadd.f32 %v977, %v1272
    %v1274 = vpop.f32.mrb[0].mxu0
    %1275 = vmatprep.mubr.bf16.mxu0 %v1102
    %1276 = vmatmul.mubr.bf16.gmra.mrb[0].mxu0 %v1101
    %v1277 = vpop.f32.mrb[0].mxu0
    %v1278 = vadd.f32 %v977, %v1277
    %v1279 = vpop.f32.mrb[0].mxu0
    %v1280 = vpop.f32.mrb[0].mxu0
    %v1281 = vadd.f32 %v977, %v1280
    %v1282 = vpop.f32.mrb[0].mxu0
    %1283 = vmatprep.mubr.bf16.mxu0 %v1104
    %1284 = vmatmul.mubr.bf16.gmra.mrb[0].mxu0 %v1103
    %v1285 = vpop.f32.mrb[0].mxu0
    %v1286 = vadd.f32 %v977, %v1285
    %v1287 = vpop.f32.mrb[0].mxu0
    %v1288 = vpop.f32.mrb[0].mxu0
    %v1289 = vadd.f32 %v977, %v1288
    %v1290 = vpop.f32.mrb[0].mxu0
    %1291 = vmatprep.mubr.bf16.mxu0 %v1106
    %1292 = vmatmul.mubr.bf16.gmra.mrb[0].mxu0 %v1105
    %v1293 = vpop.f32.mrb[0].mxu0
    %v1294 = vadd.f32 %v977, %v1293
    %v1295 = vpop.f32.mrb[0].mxu0
    %v1296 = vpop.f32.mrb[0].mxu0
    %v1297 = vadd.f32 %v977, %v1296
    %v1298 = vpop.f32.mrb[0].mxu0
    %1299 = vdwg.mxu0
    %v1300 = vmax.f32 %v1174, 0.0
    %v1301 = vmax.f32 %v1177, 0.0
    %v1302 = vmax.f32 %v1182, 0.0
    %v1303 = vmax.f32 %v1185, 0.0
    %v1304 = vmax.f32 %v1190, 0.0
    %v1305 = vmax.f32 %v1193, 0.0
    %v1306 = vmax.f32 %v1198, 0.0
    %v1307 = vmax.f32 %v1201, 0.0
    %v1308 = vmax.f32 %v1206, 0.0
    %v1309 = vmax.f32 %v1209, 0.0
    %v1310 = vmax.f32 %v1214, 0.0
    %v1311 = vmax.f32 %v1217, 0.0
    %v1312 = vmax.f32 %v1222, 0.0
    %v1313 = vmax.f32 %v1225, 0.0
    %v1314 = vmax.f32 %v1230, 0.0
    %v1315 = vmax.f32 %v1233, 0.0
    %v1316 = vmax.f32 %v1238, 0.0
    %v1317 = vmax.f32 %v1241, 0.0
    %v1318 = vmax.f32 %v1246, 0.0
    %v1319 = vmax.f32 %v1249, 0.0
    %v1320 = vmax.f32 %v1254, 0.0
    %v1321 = vmax.f32 %v1257, 0.0
    %v1322 = vmax.f32 %v1262, 0.0
    %v1323 = vmax.f32 %v1265, 0.0
    %v1324 = vmax.f32 %v1270, 0.0
    %v1325 = vmax.f32 %v1273, 0.0
    %v1326 = vmax.f32 %v1278, 0.0
    %v1327 = vmax.f32 %v1281, 0.0
    %v1328 = vmax.f32 %v1286, 0.0
    %v1329 = vmax.f32 %v1289, 0.0
    %v1330 = vmax.f32 %v1294, 0.0
    %v1331 = vmax.f32 %v1297, 0.0
    %v1332 = vpack.c.bf16 %v1301, %v1300
    %v1333 = vpack.c.bf16 %v1303, %v1302
    %v1334 = vpack.c.bf16 %v1305, %v1304
    %v1335 = vpack.c.bf16 %v1307, %v1306
    %v1336 = vpack.c.bf16 %v1309, %v1308
    %v1337 = vpack.c.bf16 %v1311, %v1310
    %v1338 = vpack.c.bf16 %v1313, %v1312
    %v1339 = vpack.c.bf16 %v1315, %v1314
    %v1340 = vpack.c.bf16 %v1317, %v1316
    %v1341 = vpack.c.bf16 %v1319, %v1318
    %v1342 = vpack.c.bf16 %v1321, %v1320
    %v1343 = vpack.c.bf16 %v1323, %v1322
    %v1344 = vpack.c.bf16 %v1325, %v1324
    %v1345 = vpack.c.bf16 %v1327, %v1326
    %v1346 = vpack.c.bf16 %v1329, %v1328
    %v1347 = vpack.c.bf16 %v1331, %v1330
    %v1348 = vld [vmem:[%s4] sm:$0xf]
    %v1349 = vld [vmem:[%s4 + $0x4] sm:$0xf]
    %v1350 = vld [vmem:[%s4 + $0x8] sm:$0xf]
    %v1351 = vld [vmem:[%s4 + $0xc] sm:$0xf]
    %v1352 = vld [vmem:[%s4 + $0x10] sm:$0xf]
    %v1353 = vld [vmem:[%s4 + $0x14] sm:$0xf]
    %v1354 = vld [vmem:[%s4 + $0x18] sm:$0xf]
    %v1355 = vld [vmem:[%s4 + $0x1c] sm:$0xf]
    %v1356 = vld [vmem:[%s4 + $0x20] sm:$0xf]
    %v1357 = vld [vmem:[%s4 + $0x24] sm:$0xf]
    %v1358 = vld [vmem:[%s4 + $0x28] sm:$0xf]
    %v1359 = vld [vmem:[%s4 + $0x2c] sm:$0xf]
    %v1360 = vld [vmem:[%s4 + $0x30] sm:$0xf]
    %v1361 = vld [vmem:[%s4 + $0x34] sm:$0xf]
    %v1362 = vld [vmem:[%s4 + $0x38] sm:$0xf]
    %v1363 = vld [vmem:[%s4 + $0x3c] sm:$0xf]
    %v1380 = vunpack.c.l.b16 %v1348
    %v1381 = vunpack.c.l.b16 %v1349
    %v1382 = vunpack.c.l.b16 %v1350
    %v1383 = vunpack.c.l.b16 %v1351
    %v1384 = vunpack.c.l.b16 %v1352
    %v1385 = vunpack.c.l.b16 %v1353
    %v1386 = vunpack.c.l.b16 %v1354
    %v1387 = vunpack.c.l.b16 %v1355
    %v1388 = vunpack.c.l.b16 %v1356
    %v1389 = vunpack.c.l.b16 %v1357
    %v1390 = vunpack.c.l.b16 %v1358
    %v1391 = vunpack.c.l.b16 %v1359
    %v1392 = vunpack.c.l.b16 %v1360
    %v1393 = vunpack.c.l.b16 %v1361
    %v1394 = vunpack.c.l.b16 %v1362
    %v1395 = vunpack.c.l.b16 %v1363
    %v1396 = vpack.c.b16 %v1381, %v1380
    %v1397 = vpack.c.b16 %v1383, %v1382
    %v1398 = vpack.c.b16 %v1385, %v1384
    %v1399 = vpack.c.b16 %v1387, %v1386
    %v1400 = vpack.c.b16 %v1389, %v1388
    %v1401 = vpack.c.b16 %v1391, %v1390
    %v1402 = vpack.c.b16 %v1393, %v1392
    %v1403 = vpack.c.b16 %v1395, %v1394
    %1412 = vmatprep.subr.bf16.mxu0 0
    %1413 = vmatpush1.bf16.msra.mxu0 %v1396
    %1414 = vmatprep.subr.bf16.mxu0 0
    %1415 = vmatpush1.bf16.msra.mxu0 %v1397
    %1416 = vmatprep.subr.bf16.mxu0 0
    %1417 = vmatpush1.bf16.msra.mxu0 %v1398
    %1418 = vmatprep.subr.bf16.mxu0 0
    %1419 = vmatpush1.bf16.msra.mxu0 %v1399
    %1420 = vmatprep.subr.bf16.mxu0 0
    %1421 = vmatpush1.bf16.msra.mxu0 %v1400
    %1422 = vmatprep.subr.bf16.mxu0 0
    %1423 = vmatpush1.bf16.msra.mxu0 %v1401
    %1424 = vmatprep.subr.bf16.mxu0 0
    %1425 = vmatpush1.bf16.msra.mxu0 %v1402
    %1426 = vmatprep.subr.bf16.mxu0 0
    %1427 = vmatpush1.bf16.msra.mxu0 %v1403
    %1428 = vmatprep.subr.bf16.mxu0 0
    %1429 = vmatpush1.bf16.msra.mxu0 0
    %1430 = vmatprep.subr.bf16.mxu0 0
    %1431 = vmatpush1.bf16.msra.mxu0 0
    %1432 = vmatprep.subr.bf16.mxu0 0
    %1433 = vmatpush1.bf16.msra.mxu0 0
    %1434 = vmatprep.subr.bf16.mxu0 0
    %1435 = vmatpush1.bf16.msra.mxu0 0
    %1436 = vmatprep.subr.bf16.mxu0 0
    %1437 = vmatpush1.bf16.msra.mxu0 0
    %1438 = vmatprep.subr.bf16.mxu0 0
    %1439 = vmatpush1.bf16.msra.mxu0 0
    %1440 = vmatprep.subr.bf16.mxu0 0
    %1441 = vmatpush1.bf16.msra.mxu0 0
    %1442 = vmatprep.subr.bf16.mxu0 0
    %1443 = vmatpush1.bf16.msra.mxu0 0
    %1444 = vmatprep.mubr.bf16.mxu0 0
    %1445 = vmatmul.mubr.bf16.gmra.mrb[0].mxu0 %v1332
    %v1446 = vpop.f32.mrb[0].mxu0
    %v1447 = vadd.f32 0.0, %v1446
    %v1448 = vpop.f32.mrb[0].mxu0
    %v1449 = vpop.f32.mrb[0].mxu0
    %v1450 = vadd.f32 0.0, %v1449
    %v1451 = vpop.f32.mrb[0].mxu0
    %1452 = vmatprep.mubr.bf16.mxu0 0
    %1453 = vmatmul.mubr.bf16.gmra.mrb[0].mxu0 %v1333
    %v1454 = vpop.f32.mrb[0].mxu0
    %v1455 = vadd.f32 0.0, %v1454
    %v1456 = vpop.f32.mrb[0].mxu0
    %v1457 = vpop.f32.mrb[0].mxu0
    %v1458 = vadd.f32 0.0, %v1457
    %v1459 = vpop.f32.mrb[0].mxu0
    %1460 = vmatprep.mubr.bf16.mxu0 0
    %1461 = vmatmul.mubr.bf16.gmra.mrb[0].mxu0 %v1334
    %v1462 = vpop.f32.mrb[0].mxu0
    %v1463 = vadd.f32 0.0, %v1462
    %v1464 = vpop.f32.mrb[0].mxu0
    %v1465 = vpop.f32.mrb[0].mxu0
    %v1466 = vadd.f32 0.0, %v1465
    %v1467 = vpop.f32.mrb[0].mxu0
    %1468 = vmatprep.mubr.bf16.mxu0 0
    %1469 = vmatmul.mubr.bf16.gmra.mrb[0].mxu0 %v1335
    %v1470 = vpop.f32.mrb[0].mxu0
    %v1471 = vadd.f32 0.0, %v1470
    %v1472 = vpop.f32.mrb[0].mxu0
    %v1473 = vpop.f32.mrb[0].mxu0
    %v1474 = vadd.f32 0.0, %v1473
    %v1475 = vpop.f32.mrb[0].mxu0
    %1476 = vmatprep.mubr.bf16.mxu0 0
    %1477 = vmatmul.mubr.bf16.gmra.mrb[0].mxu0 %v1336
    %v1478 = vpop.f32.mrb[0].mxu0
    %v1479 = vadd.f32 0.0, %v1478
    %v1480 = vpop.f32.mrb[0].mxu0
    %v1481 = vpop.f32.mrb[0].mxu0
    %v1482 = vadd.f32 0.0, %v1481
    %v1483 = vpop.f32.mrb[0].mxu0
    %1484 = vmatprep.mubr.bf16.mxu0 0
    %1485 = vmatmul.mubr.bf16.gmra.mrb[0].mxu0 %v1337
    %v1486 = vpop.f32.mrb[0].mxu0
    %v1487 = vadd.f32 0.0, %v1486
    %v1488 = vpop.f32.mrb[0].mxu0
    %v1489 = vpop.f32.mrb[0].mxu0
    %v1490 = vadd.f32 0.0, %v1489
    %v1491 = vpop.f32.mrb[0].mxu0
    %1492 = vmatprep.mubr.bf16.mxu0 0
    %1493 = vmatmul.mubr.bf16.gmra.mrb[0].mxu0 %v1338
    %v1494 = vpop.f32.mrb[0].mxu0
    %v1495 = vadd.f32 0.0, %v1494
    %v1496 = vpop.f32.mrb[0].mxu0
    %v1497 = vpop.f32.mrb[0].mxu0
    %v1498 = vadd.f32 0.0, %v1497
    %v1499 = vpop.f32.mrb[0].mxu0
    %1500 = vmatprep.mubr.bf16.mxu0 0
    %1501 = vmatmul.mubr.bf16.gmra.mrb[0].mxu0 %v1339
    %v1502 = vpop.f32.mrb[0].mxu0
    %v1503 = vadd.f32 0.0, %v1502
    %v1504 = vpop.f32.mrb[0].mxu0
    %v1505 = vpop.f32.mrb[0].mxu0
    %v1506 = vadd.f32 0.0, %v1505
    %v1507 = vpop.f32.mrb[0].mxu0
    %1508 = vmatprep.mubr.bf16.mxu0 0
    %1509 = vmatmul.mubr.bf16.gmra.mrb[0].mxu0 %v1340
    %v1510 = vpop.f32.mrb[0].mxu0
    %v1511 = vadd.f32 0.0, %v1510
    %v1512 = vpop.f32.mrb[0].mxu0
    %v1513 = vpop.f32.mrb[0].mxu0
    %v1514 = vadd.f32 0.0, %v1513
    %v1515 = vpop.f32.mrb[0].mxu0
    %1516 = vmatprep.mubr.bf16.mxu0 0
    %1517 = vmatmul.mubr.bf16.gmra.mrb[0].mxu0 %v1341
    %v1518 = vpop.f32.mrb[0].mxu0
    %v1519 = vadd.f32 0.0, %v1518
    %v1520 = vpop.f32.mrb[0].mxu0
    %v1521 = vpop.f32.mrb[0].mxu0
    %v1522 = vadd.f32 0.0, %v1521
    %v1523 = vpop.f32.mrb[0].mxu0
    %1524 = vmatprep.mubr.bf16.mxu0 0
    %1525 = vmatmul.mubr.bf16.gmra.mrb[0].mxu0 %v1342
    %v1526 = vpop.f32.mrb[0].mxu0
    %v1527 = vadd.f32 0.0, %v1526
    %v1528 = vpop.f32.mrb[0].mxu0
    %v1529 = vpop.f32.mrb[0].mxu0
    %v1530 = vadd.f32 0.0, %v1529
    %v1531 = vpop.f32.mrb[0].mxu0
    %1532 = vmatprep.mubr.bf16.mxu0 0
    %1533 = vmatmul.mubr.bf16.gmra.mrb[0].mxu0 %v1343
    %v1534 = vpop.f32.mrb[0].mxu0
    %v1535 = vadd.f32 0.0, %v1534
    %v1536 = vpop.f32.mrb[0].mxu0
    %v1537 = vpop.f32.mrb[0].mxu0
    %v1538 = vadd.f32 0.0, %v1537
    %v1539 = vpop.f32.mrb[0].mxu0
    %1540 = vmatprep.mubr.bf16.mxu0 0
    %1541 = vmatmul.mubr.bf16.gmra.mrb[0].mxu0 %v1344
    %v1542 = vpop.f32.mrb[0].mxu0
    %v1543 = vadd.f32 0.0, %v1542
    %v1544 = vpop.f32.mrb[0].mxu0
    %v1545 = vpop.f32.mrb[0].mxu0
    %v1546 = vadd.f32 0.0, %v1545
    %v1547 = vpop.f32.mrb[0].mxu0
    %1548 = vmatprep.mubr.bf16.mxu0 0
    %1549 = vmatmul.mubr.bf16.gmra.mrb[0].mxu0 %v1345
    %v1550 = vpop.f32.mrb[0].mxu0
    %v1551 = vadd.f32 0.0, %v1550
    %v1552 = vpop.f32.mrb[0].mxu0
    %v1553 = vpop.f32.mrb[0].mxu0
    %v1554 = vadd.f32 0.0, %v1553
    %v1555 = vpop.f32.mrb[0].mxu0
    %1556 = vmatprep.mubr.bf16.mxu0 0
    %1557 = vmatmul.mubr.bf16.gmra.mrb[0].mxu0 %v1346
    %v1558 = vpop.f32.mrb[0].mxu0
    %v1559 = vadd.f32 0.0, %v1558
    %v1560 = vpop.f32.mrb[0].mxu0
    %v1561 = vpop.f32.mrb[0].mxu0
    %v1562 = vadd.f32 0.0, %v1561
    %v1563 = vpop.f32.mrb[0].mxu0
    %1564 = vmatprep.mubr.bf16.mxu0 0
    %1565 = vmatmul.mubr.bf16.gmra.mrb[0].mxu0 %v1347
    %v1566 = vpop.f32.mrb[0].mxu0
    %v1567 = vadd.f32 0.0, %v1566
    %v1568 = vpop.f32.mrb[0].mxu0
    %v1569 = vpop.f32.mrb[0].mxu0
    %v1570 = vadd.f32 0.0, %v1569
    %v1571 = vpop.f32.mrb[0].mxu0
    %1572 = vdwg.mxu0
    %v1573 = vpack.c.bf16 %v1450, %v1447
    %v1574 = vpack.c.bf16 %v1458, %v1455
    %v1575 = vpack.c.bf16 %v1466, %v1463
    %v1576 = vpack.c.bf16 %v1474, %v1471
    %v1577 = vpack.c.bf16 %v1482, %v1479
    %v1578 = vpack.c.bf16 %v1490, %v1487
    %v1579 = vpack.c.bf16 %v1498, %v1495
    %v1580 = vpack.c.bf16 %v1506, %v1503
    %v1581 = vpack.c.bf16 %v1514, %v1511
    %v1582 = vpack.c.bf16 %v1522, %v1519
    %v1583 = vpack.c.bf16 %v1530, %v1527
    %v1584 = vpack.c.bf16 %v1538, %v1535
    %v1585 = vpack.c.bf16 %v1546, %v1543
    %v1586 = vpack.c.bf16 %v1554, %v1551
    %v1587 = vpack.c.bf16 %v1562, %v1559
    %v1588 = vpack.c.bf16 %v1570, %v1567
    %v1589 = vld [vmem:[%s5] sm:$0x1]
    %v1591 = vlaneseq
    %v1592 = vshrl.u32 %v1591, 7
    %v1593 = vsub.s32 0, %v1592
    %v1594 = vrot.slane %v1589, %v1593
    %1596 = vmatprep.subr.bf16.mxu0 0
    %1597 = vmatpush1.bf16.msra.mxu0 %v1573
    %1598 = vmatprep.subr.bf16.mxu0 0
    %1599 = vmatpush1.bf16.msra.mxu0 %v1574
    %1600 = vmatprep.subr.bf16.mxu0 0
    %1601 = vmatpush1.bf16.msra.mxu0 %v1575
    %1602 = vmatprep.subr.bf16.mxu0 0
    %1603 = vmatpush1.bf16.msra.mxu0 %v1576
    %1604 = vmatprep.subr.bf16.mxu0 0
    %1605 = vmatpush1.bf16.msra.mxu0 %v1577
    %1606 = vmatprep.subr.bf16.mxu0 0
    %1607 = vmatpush1.bf16.msra.mxu0 %v1578
    %1608 = vmatprep.subr.bf16.mxu0 0
    %1609 = vmatpush1.bf16.msra.mxu0 %v1579
    %1610 = vmatprep.subr.bf16.mxu0 0
    %1611 = vmatpush1.bf16.msra.mxu0 %v1580
    %1612 = vmatprep.subr.bf16.mxu0 0
    %1613 = vmatpush1.bf16.msra.mxu0 %v1581
    %1614 = vmatprep.subr.bf16.mxu0 0
    %1615 = vmatpush1.bf16.msra.mxu0 %v1582
    %1616 = vmatprep.subr.bf16.mxu0 0
    %1617 = vmatpush1.bf16.msra.mxu0 %v1583
    %1618 = vmatprep.subr.bf16.mxu0 0
    %1619 = vmatpush1.bf16.msra.mxu0 %v1584
    %1620 = vmatprep.subr.bf16.mxu0 0
    %1621 = vmatpush1.bf16.msra.mxu0 %v1585
    %1622 = vmatprep.subr.bf16.mxu0 0
    %1623 = vmatpush1.bf16.msra.mxu0 %v1586
    %1624 = vmatprep.subr.bf16.mxu0 0
    %1625 = vmatpush1.bf16.msra.mxu0 %v1587
    %1626 = vmatprep.subr.bf16.mxu0 0
    %1627 = vmatpush1.bf16.msra.mxu0 %v1588
    %1628 = vmatprep.mubr.bf16.mxu0 %v1076
    %1629 = vmatmul.mubr.bf16.gmra.mrb[0].mxu0 %v1075
    %v1630 = vpop.f32.mrb[0].mxu0
    %v1631 = vadd.f32 %v1594, %v1630
    %v1632 = vpop.f32.mrb[0].mxu0
    %v1633 = vpop.f32.mrb[0].mxu0
    %v1634 = vadd.f32 %v1594, %v1633
    %v1635 = vpop.f32.mrb[0].mxu0
    %1636 = vmatprep.mubr.bf16.mxu0 %v1078
    %1637 = vmatmul.mubr.bf16.gmra.mrb[0].mxu0 %v1077
    %v1638 = vpop.f32.mrb[0].mxu0
    %v1639 = vadd.f32 %v1594, %v1638
    %v1640 = vpop.f32.mrb[0].mxu0
    %v1641 = vpop.f32.mrb[0].mxu0
    %v1642 = vadd.f32 %v1594, %v1641
    %v1643 = vpop.f32.mrb[0].mxu0
    %1644 = vmatprep.mubr.bf16.mxu0 %v1080
    %1645 = vmatmul.mubr.bf16.gmra.mrb[0].mxu0 %v1079
    %v1646 = vpop.f32.mrb[0].mxu0
    %v1647 = vadd.f32 %v1594, %v1646
    %v1648 = vpop.f32.mrb[0].mxu0
    %v1649 = vpop.f32.mrb[0].mxu0
    %v1650 = vadd.f32 %v1594, %v1649
    %v1651 = vpop.f32.mrb[0].mxu0
    %1652 = vmatprep.mubr.bf16.mxu0 %v1082
    %1653 = vmatmul.mubr.bf16.gmra.mrb[0].mxu0 %v1081
    %v1654 = vpop.f32.mrb[0].mxu0
    %v1655 = vadd.f32 %v1594, %v1654
    %v1656 = vpop.f32.mrb[0].mxu0
    %v1657 = vpop.f32.mrb[0].mxu0
    %v1658 = vadd.f32 %v1594, %v1657
    %v1659 = vpop.f32.mrb[0].mxu0
    %1660 = vmatprep.mubr.bf16.mxu0 %v1084
    %1661 = vmatmul.mubr.bf16.gmra.mrb[0].mxu0 %v1083
    %v1662 = vpop.f32.mrb[0].mxu0
    %v1663 = vadd.f32 %v1594, %v1662
    %v1664 = vpop.f32.mrb[0].mxu0
    %v1665 = vpop.f32.mrb[0].mxu0
    %v1666 = vadd.f32 %v1594, %v1665
    %v1667 = vpop.f32.mrb[0].mxu0
    %1668 = vmatprep.mubr.bf16.mxu0 %v1086
    %1669 = vmatmul.mubr.bf16.gmra.mrb[0].mxu0 %v1085
    %v1670 = vpop.f32.mrb[0].mxu0
    %v1671 = vadd.f32 %v1594, %v1670
    %v1672 = vpop.f32.mrb[0].mxu0
    %v1673 = vpop.f32.mrb[0].mxu0
    %v1674 = vadd.f32 %v1594, %v1673
    %v1675 = vpop.f32.mrb[0].mxu0
    %1676 = vmatprep.mubr.bf16.mxu0 %v1088
    %1677 = vmatmul.mubr.bf16.gmra.mrb[0].mxu0 %v1087
    %v1678 = vpop.f32.mrb[0].mxu0
    %v1679 = vadd.f32 %v1594, %v1678
    %v1680 = vpop.f32.mrb[0].mxu0
    %v1681 = vpop.f32.mrb[0].mxu0
    %v1682 = vadd.f32 %v1594, %v1681
    %v1683 = vpop.f32.mrb[0].mxu0
    %1684 = vmatprep.mubr.bf16.mxu0 %v1090
    %1685 = vmatmul.mubr.bf16.gmra.mrb[0].mxu0 %v1089
    %v1686 = vpop.f32.mrb[0].mxu0
    %v1687 = vadd.f32 %v1594, %v1686
    %v1688 = vpop.f32.mrb[0].mxu0
    %v1689 = vpop.f32.mrb[0].mxu0
    %v1690 = vadd.f32 %v1594, %v1689
    %v1691 = vpop.f32.mrb[0].mxu0
    %1692 = vmatprep.mubr.bf16.mxu0 %v1092
    %1693 = vmatmul.mubr.bf16.gmra.mrb[0].mxu0 %v1091
    %v1694 = vpop.f32.mrb[0].mxu0
    %v1695 = vadd.f32 %v1594, %v1694
    %v1696 = vpop.f32.mrb[0].mxu0
    %v1697 = vpop.f32.mrb[0].mxu0
    %v1698 = vadd.f32 %v1594, %v1697
    %v1699 = vpop.f32.mrb[0].mxu0
    %1700 = vmatprep.mubr.bf16.mxu0 %v1094
    %1701 = vmatmul.mubr.bf16.gmra.mrb[0].mxu0 %v1093
    %v1702 = vpop.f32.mrb[0].mxu0
    %v1703 = vadd.f32 %v1594, %v1702
    %v1704 = vpop.f32.mrb[0].mxu0
    %v1705 = vpop.f32.mrb[0].mxu0
    %v1706 = vadd.f32 %v1594, %v1705
    %v1707 = vpop.f32.mrb[0].mxu0
    %1708 = vmatprep.mubr.bf16.mxu0 %v1096
    %1709 = vmatmul.mubr.bf16.gmra.mrb[0].mxu0 %v1095
    %v1710 = vpop.f32.mrb[0].mxu0
    %v1711 = vadd.f32 %v1594, %v1710
    %v1712 = vpop.f32.mrb[0].mxu0
    %v1713 = vpop.f32.mrb[0].mxu0
    %v1714 = vadd.f32 %v1594, %v1713
    %v1715 = vpop.f32.mrb[0].mxu0
    %1716 = vmatprep.mubr.bf16.mxu0 %v1098
    %1717 = vmatmul.mubr.bf16.gmra.mrb[0].mxu0 %v1097
    %v1718 = vpop.f32.mrb[0].mxu0
    %v1719 = vadd.f32 %v1594, %v1718
    %v1720 = vpop.f32.mrb[0].mxu0
    %v1721 = vpop.f32.mrb[0].mxu0
    %v1722 = vadd.f32 %v1594, %v1721
    %v1723 = vpop.f32.mrb[0].mxu0
    %1724 = vmatprep.mubr.bf16.mxu0 %v1100
    %1725 = vmatmul.mubr.bf16.gmra.mrb[0].mxu0 %v1099
    %v1726 = vpop.f32.mrb[0].mxu0
    %v1727 = vadd.f32 %v1594, %v1726
    %v1728 = vpop.f32.mrb[0].mxu0
    %v1729 = vpop.f32.mrb[0].mxu0
    %v1730 = vadd.f32 %v1594, %v1729
    %v1731 = vpop.f32.mrb[0].mxu0
    %1732 = vmatprep.mubr.bf16.mxu0 %v1102
    %1733 = vmatmul.mubr.bf16.gmra.mrb[0].mxu0 %v1101
    %v1734 = vpop.f32.mrb[0].mxu0
    %v1735 = vadd.f32 %v1594, %v1734
    %v1736 = vpop.f32.mrb[0].mxu0
    %v1737 = vpop.f32.mrb[0].mxu0
    %v1738 = vadd.f32 %v1594, %v1737
    %v1739 = vpop.f32.mrb[0].mxu0
    %1740 = vmatprep.mubr.bf16.mxu0 %v1104
    %1741 = vmatmul.mubr.bf16.gmra.mrb[0].mxu0 %v1103
    %v1742 = vpop.f32.mrb[0].mxu0
    %v1743 = vadd.f32 %v1594, %v1742
    %v1744 = vpop.f32.mrb[0].mxu0
    %v1745 = vpop.f32.mrb[0].mxu0
    %v1746 = vadd.f32 %v1594, %v1745
    %v1747 = vpop.f32.mrb[0].mxu0
    %1748 = vmatprep.mubr.bf16.mxu0 %v1106
    %1749 = vmatmul.mubr.bf16.gmra.mrb[0].mxu0 %v1105
    %v1750 = vpop.f32.mrb[0].mxu0
    %v1751 = vadd.f32 %v1594, %v1750
    %v1752 = vpop.f32.mrb[0].mxu0
    %v1753 = vpop.f32.mrb[0].mxu0
    %v1754 = vadd.f32 %v1594, %v1753
    %v1755 = vpop.f32.mrb[0].mxu0
    %1756 = vdwg.mxu0
    %1757 = vst [vmem:[#allocation5] sm:$0xff] %v1631
    %1758 = vst [vmem:[#allocation5 + $0x8] sm:$0xff] %v1634
    %1759 = vst [vmem:[#allocation5 + $0x10] sm:$0xff] %v1639
    %1760 = vst [vmem:[#allocation5 + $0x18] sm:$0xff] %v1642
    %1761 = vst [vmem:[#allocation5 + $0x20] sm:$0xff] %v1647
    %1762 = vst [vmem:[#allocation5 + $0x28] sm:$0xff] %v1650
    %1763 = vst [vmem:[#allocation5 + $0x30] sm:$0xff] %v1655
    %1764 = vst [vmem:[#allocation5 + $0x38] sm:$0xff] %v1658
    %1765 = vst [vmem:[#allocation5 + $0x40] sm:$0xff] %v1663
    %1766 = vst [vmem:[#allocation5 + $0x48] sm:$0xff] %v1666
    %1767 = vst [vmem:[#allocation5 + $0x50] sm:$0xff] %v1671
    %1768 = vst [vmem:[#allocation5 + $0x58] sm:$0xff] %v1674
    %1769 = vst [vmem:[#allocation5 + $0x60] sm:$0xff] %v1679
    %1770 = vst [vmem:[#allocation5 + $0x68] sm:$0xff] %v1682
    %1771 = vst [vmem:[#allocation5 + $0x70] sm:$0xff] %v1687
    %1772 = vst [vmem:[#allocation5 + $0x78] sm:$0xff] %v1690
    %1773 = vst [vmem:[#allocation5 + $0x80] sm:$0xff] %v1695
    %1774 = vst [vmem:[#allocation5 + $0x88] sm:$0xff] %v1698
    %1775 = vst [vmem:[#allocation5 + $0x90] sm:$0xff] %v1703
    %1776 = vst [vmem:[#allocation5 + $0x98] sm:$0xff] %v1706
    %1777 = vst [vmem:[#allocation5 + $0xa0] sm:$0xff] %v1711
    %1778 = vst [vmem:[#allocation5 + $0xa8] sm:$0xff] %v1714
    %1779 = vst [vmem:[#allocation5 + $0xb0] sm:$0xff] %v1719
    %1780 = vst [vmem:[#allocation5 + $0xb8] sm:$0xff] %v1722
    %1781 = vst [vmem:[#allocation5 + $0xc0] sm:$0xff] %v1727
    %1782 = vst [vmem:[#allocation5 + $0xc8] sm:$0xff] %v1730
    %1783 = vst [vmem:[#allocation5 + $0xd0] sm:$0xff] %v1735
    %1784 = vst [vmem:[#allocation5 + $0xd8] sm:$0xff] %v1738
    %1785 = vst [vmem:[#allocation5 + $0xe0] sm:$0xff] %v1743
    %1786 = vst [vmem:[#allocation5 + $0xe8] sm:$0xff] %v1746
    %1787 = vst [vmem:[#allocation5 + $0xf0] sm:$0xff] %v1751
    %1788 = vst [vmem:[#allocation5 + $0xf8] sm:$0xff] %v1754
    %v1789 = vadd.f32 %v1631, %v1634
    %v1790 = vadd.f32 %v1789, %v1639
    %v1791 = vadd.f32 %v1790, %v1642
    %v1792 = vadd.f32 %v1791, %v1647
    %v1793 = vadd.f32 %v1792, %v1650
    %v1794 = vadd.f32 %v1793, %v1655
    %v1795 = vadd.f32 %v1794, %v1658
    %v1796 = vadd.f32 %v1795, %v1663
    %v1797 = vadd.f32 %v1796, %v1666
    %v1798 = vadd.f32 %v1797, %v1671
    %v1799 = vadd.f32 %v1798, %v1674
    %v1800 = vadd.f32 %v1799, %v1679
    %v1801 = vadd.f32 %v1800, %v1682
    %v1802 = vadd.f32 %v1801, %v1687
    %v1803 = vadd.f32 %v1802, %v1690
    %v1804 = vadd.f32 %v1803, %v1695
    %v1805 = vadd.f32 %v1804, %v1698
    %v1806 = vadd.f32 %v1805, %v1703
    %v1807 = vadd.f32 %v1806, %v1706
    %v1808 = vadd.f32 %v1807, %v1711
    %v1809 = vadd.f32 %v1808, %v1714
    %v1810 = vadd.f32 %v1809, %v1719
    %v1811 = vadd.f32 %v1810, %v1722
    %v1812 = vadd.f32 %v1811, %v1727
    %v1813 = vadd.f32 %v1812, %v1730
    %v1814 = vadd.f32 %v1813, %v1735
    %v1815 = vadd.f32 %v1814, %v1738
    %v1816 = vadd.f32 %v1815, %v1743
    %v1817 = vadd.f32 %v1816, %v1746
    %v1818 = vadd.f32 %v1817, %v1751
    %v1819 = vadd.f32 %v1818, %v1754
    %v1820 = vrot.slane %v1819, 4
    %v1821 = vadd.f32 %v1819, %v1820
    %v1822 = vrot.slane %v1821, 2
    %v1823 = vadd.f32 %v1821, %v1822
    %v1824 = vrot.slane %v1823, 1
    %v1825 = vadd.f32 %v1823, %v1824
    %v1826 = vmul.f32 %v1825, 0.00390625
    %1827 = vst [vmem:[#allocation6] sm:$0x1] %v1826
    // Predicated region
    $region30: #{tpu_custom_call.1} parent=1 // pred_check
      _
    $region31: #{tpu_custom_call.1} parent=1 // pred_check_branch
      %1829 = sbr.rel (0) target = $region33
    $region32: #{tpu_custom_call.1} parent=1 // pred_region
      %s1831 = ssub.s32 4096, 4096
      %1832 = vsyncadd [#allocation4], %s1831
      %s1833 = sshll.u32 [#allocation5], 4
      %s1834 = int_to_ptr.vmem [resolvable:$true] %s1833
      %1839 = dma.vmem_to_hbm [thread:$0]  %s1834, 4096, %s6, [#allocation4], 128, 128, 8
    $region33: #{tpu_custom_call.1} parent=1 // pred_fallthru
      _
    // Predicated region
    $region34: #{tpu_custom_call.1} parent=1 // pred_check
      _
    $region35: #{tpu_custom_call.1} parent=1 // pred_check_branch
      %1841 = sbr.rel (0) target = $region37
    $region36: #{tpu_custom_call.1} parent=1 // pred_region
      %s1843 = ssub.s32 16, 16
      %1844 = vsyncadd [#allocation7], %s1843
      %s1846 = sshll.u32 [#allocation6], 4
      %s1847 = int_to_ptr.vmem [resolvable:$true] %s1846
      %1849 = dma.vmem_to_hbm [thread:$0]  %s1847, 16, %s7, [#allocation7]
    $region37: #{tpu_custom_call.1} parent=1 // pred_fallthru
      _
    // Predicated region
    $region38: #{tpu_custom_call.1} parent=1 // pred_check
      _
    $region39: #{tpu_custom_call.1} parent=1 // pred_check_branch
      %1851 = sbr.rel (0) target = $region41
    $region40: #{tpu_custom_call.1} parent=1 // pred_region
      %1852 = dma.done [#allocation4], 4096
    $region41: #{tpu_custom_call.1} parent=1 // pred_fallthru
      _
    // Predicated region
    $region42: #{tpu_custom_call.1} parent=1 // pred_check
      _
    $region43: #{tpu_custom_call.1} parent=1 // pred_check_branch
      %1854 = sbr.rel (0) target = $region45
    $region44: #{tpu_custom_call.1} parent=1 // pred_region
      %1855 = dma.done [#allocation7], 16
    $region45: #{tpu_custom_call.1} parent=1 // pred_fallthru
      _
    %1856 = vsyncpa [#allocation3], 1
    %1857 = vsyncpa [#allocation4], 1
    %1858 = vsyncpa [#allocation7], 1

</llo_original>
